<compile_context>
chip_gen: v6e
topology: v6e:2x2x1
jax: 0.10.0
libtpu: 0.0.40
codegen_flags: <defaults>
</compile_context>

<pallas_src>
import functools

import jax
import jax.numpy as jnp
from jax import lax
from jax.experimental import pallas as pl
from jax.experimental.pallas import tpu as pltpu


def _self_attention_wide_kernel(x_ref, wq_ref, wk_ref, wv_ref, wu_ref, bu_ref,
                                out_ref, *, emb, heads, mask):
    """Grid = (batch,). One full multi-head attention per batch element.

    Blocks:
      x_ref   : (1, T, E)   tokens for this batch element
      wq/wk/wv: (E, H*E)    fused projection slabs (VMEM-resident, constant map)
      wu_ref  : (H*E, E)    unifyheads weight
      bu_ref  : (1, E)      unifyheads bias
      out_ref : (1, T, E)   written once per grid step (single store)
    """
    e = emb
    h = heads
    x = x_ref[0]                                    # (T, E)
    t = x.shape[0]
    scale = e ** (-0.25)

    # Fused projections: one wide matmul per Q/K/V (N = H*E on the MXU).
    q = jnp.dot(x, wq_ref[...], preferred_element_type=jnp.float32) * scale
    k = jnp.dot(x, wk_ref[...], preferred_element_type=jnp.float32) * scale
    v = jnp.dot(x, wv_ref[...], preferred_element_type=jnp.float32)

    # Causal mask built once per grid step (not once per head).
    if mask:
        row = lax.broadcasted_iota(jnp.int32, (t, t), 0)
        col = lax.broadcasted_iota(jnp.int32, (t, t), 1)
        causal = col > row                          # mask_diagonal=False

    # Per-head attention (static unroll; `heads` is a small compile-time int).
    # Scores contract the feature axis directly so K is consumed by the MXU
    # without materializing a transpose.
    head_outs = []
    for hi in range(h):
        sl = slice(hi * e, (hi + 1) * e)
        qh, kh, vh = q[:, sl], k[:, sl], v[:, sl]   # (T, E) each
        scores = lax.dot_general(qh, kh, (((1,), (1,)), ((), ())),
                                 preferred_element_type=jnp.float32)  # (T, T)
        if mask:
            scores = jnp.where(causal, -jnp.inf, scores)
        p = jax.nn.softmax(scores, axis=-1)
        head_outs.append(jnp.dot(p, vh, preferred_element_type=jnp.float32))

    # Concatenated heads -> ONE (T, H*E) @ (H*E, E) output projection + bias.
    concat = jnp.concatenate(head_outs, axis=-1)     # (T, H*E)
    out = jnp.dot(concat, wu_ref[...], preferred_element_type=jnp.float32)
    out = out + bu_ref[...]                          # bias broadcast over T
    out_ref[0] = out.astype(out_ref.dtype)

    # TODO(synk): for large T, tile queries and stream K/V tiles with an online
    # (flash-style) softmax instead of materializing the (T, T) score matrix,
    # and re-derive VMEM tile sizes for v7x's 64 MiB VMEM.


def self_attention_wide(x, wq, wk, wv, wu, bu, *, heads, mask=False):
    """Pallas implementation of SelfAttentionWide.forward.

    x  : (B, T, E) float32
    wq, wk, wv : (E, H*E)   (== nn.Linear(emb, emb*heads).weight.T)
    wu : (H*E, E)           (== nn.Linear(heads*emb, emb).weight.T)
    bu : (E,)               unifyheads bias
    """
    b, t, e = x.shape
    h = heads
    assert wq.shape == (e, h * e) and wk.shape == (e, h * e)
    assert wv.shape == (e, h * e) and wu.shape == (h * e, e)
    assert bu.shape == (e,)

    bu_r = bu.reshape(1, e)
    kernel = functools.partial(_self_attention_wide_kernel,
                               emb=e, heads=h, mask=mask)

    return pl.pallas_call(
        kernel,
        out_shape=jax.ShapeDtypeStruct((b, t, e), jnp.float32),
        grid=(b,),
        in_specs=[
            pl.BlockSpec((1, t, e), lambda bi: (bi, 0, 0)),     # x
            pl.BlockSpec((e, h * e), lambda bi: (0, 0)),        # wq (resident)
            pl.BlockSpec((e, h * e), lambda bi: (0, 0)),        # wk (resident)
            pl.BlockSpec((e, h * e), lambda bi: (0, 0)),        # wv (resident)
            pl.BlockSpec((h * e, e), lambda bi: (0, 0)),        # wu (resident)
            pl.BlockSpec((1, e), lambda bi: (0, 0)),            # bias
        ],
        out_specs=pl.BlockSpec((1, t, e), lambda bi: (bi, 0, 0)),
        compiler_params=pltpu.CompilerParams(
            dimension_semantics=("parallel",)),
    )(x, wq, wk, wv, wu, bu_r)


def _reference(x, wq, wk, wv, wu, bu, *, heads, mask=False):
    """Pure-JAX transcription of the PyTorch forward, for verification."""
    b, t, e = x.shape
    h = heads
    keys = (x @ wk).reshape(b, t, h, e)
    queries = (x @ wq).reshape(b, t, h, e)
    values = (x @ wv).reshape(b, t, h, e)
    keys = keys.transpose(0, 2, 1, 3).reshape(b * h, t, e)
    queries = queries.transpose(0, 2, 1, 3).reshape(b * h, t, e)
    values = values.transpose(0, 2, 1, 3).reshape(b * h, t, e)
    queries = queries / e ** 0.25
    keys = keys / e ** 0.25
    dot = jnp.einsum("bte,bse->bts", queries, keys)
    if mask:
        row = jnp.arange(t)[:, None]
        col = jnp.arange(t)[None, :]
        dot = jnp.where(col > row, -jnp.inf, dot)
    dot = jax.nn.softmax(dot, axis=2)
    out = jnp.einsum("bts,bse->bte", dot, values).reshape(b, h, t, e)
    out = out.transpose(0, 2, 1, 3).reshape(b, t, h * e)
    return out @ wu + bu


if __name__ == "__main__":
    B, T, E, HEADS = 2, 8, 32, 8

    key = jax.random.PRNGKey(0)
    kx, kq, kk, kv, ku, kb = jax.random.split(key, 6)

    x = jax.random.normal(kx, (B, T, E), dtype=jnp.float32)
    # Deterministic synthetic parameter init (shapes from the module __init__).
    wq = jax.random.normal(kq, (E, HEADS * E), dtype=jnp.float32) * 0.05
    wk = jax.random.normal(kk, (E, HEADS * E), dtype=jnp.float32) * 0.05
    wv = jax.random.normal(kv, (E, HEADS * E), dtype=jnp.float32) * 0.05
    wu = jax.random.normal(ku, (HEADS * E, E), dtype=jnp.float32) * 0.05
    bu = jax.random.normal(kb, (E,), dtype=jnp.float32) * 0.05

    # Unmasked path.
    out = self_attention_wide(x, wq, wk, wv, wu, bu, heads=HEADS, mask=False)
    out = jax.block_until_ready(out)
    ref = _reference(x, wq, wk, wv, wu, bu, heads=HEADS, mask=False)
    assert out.shape == (B, T, E)
    assert jnp.allclose(out, ref, atol=1e-4, rtol=1e-4), "mismatch (mask=False)"

    # Masked (causal) path.
    out_m = self_attention_wide(x, wq, wk, wv, wu, bu, heads=HEADS, mask=True)
    out_m = jax.block_until_ready(out_m)
    ref_m = _reference(x, wq, wk, wv, wu, bu, heads=HEADS, mask=True)
    assert jnp.allclose(out_m, ref_m, atol=1e-4, rtol=1e-4), "mismatch (mask=True)"

    print("KERNEL_OK")
</pallas_src>

<mosaic_0001>
module attributes {stable_mosaic.version = 11 : i64} {
  func.func @_self_attention_wide_kernel(%arg0: i32, %arg1: memref<1x8x32xf32, #tpu.memory_space<vmem>>, %arg2: memref<32x256xf32, #tpu.memory_space<vmem>>, %arg3: memref<32x256xf32, #tpu.memory_space<vmem>>, %arg4: memref<32x256xf32, #tpu.memory_space<vmem>>, %arg5: memref<256x32xf32, #tpu.memory_space<vmem>>, %arg6: memref<1x32xf32, #tpu.memory_space<vmem>>, %arg7: memref<1x8x32xf32, #tpu.memory_space<vmem>>) attributes {dimension_semantics = [#tpu.dimension_semantics<parallel>], iteration_bounds = array<i64: 2>, scalar_prefetch = 0 : i64, scratch_operands = 0 : i64, tpu.core_type = #tpu.core_type<tc>, window_params = [{transform_indices = @transform_0, window_bounds = array<i64: 1, 8, 32>}, {pipeline_mode = #tpu.pipeline_mode<synchronous>, transform_indices = @transform_1, window_bounds = array<i64: 32, 256>}, {pipeline_mode = #tpu.pipeline_mode<synchronous>, transform_indices = @transform_2, window_bounds = array<i64: 32, 256>}, {pipeline_mode = #tpu.pipeline_mode<synchronous>, transform_indices = @transform_3, window_bounds = array<i64: 32, 256>}, {pipeline_mode = #tpu.pipeline_mode<synchronous>, transform_indices = @transform_4, window_bounds = array<i64: 256, 32>}, {pipeline_mode = #tpu.pipeline_mode<synchronous>, transform_indices = @transform_5, window_bounds = array<i64: 1, 32>}, {transform_indices = @transform_6, window_bounds = array<i64: 1, 8, 32>}]} {
    %c0 = arith.constant 0 : index
    %c0_0 = arith.constant 0 : index
    %c0_1 = arith.constant 0 : index
    %0 = vector.load %arg1[%c0, %c0_0, %c0_1] : memref<1x8x32xf32, #tpu.memory_space<vmem>>, vector<1x8x32xf32>
    %1 = vector.shape_cast %0 : vector<1x8x32xf32> to vector<8x32xf32>
    %c0_2 = arith.constant 0 : index
    %c0_3 = arith.constant 0 : index
    %2 = vector.load %arg2[%c0_2, %c0_3] : memref<32x256xf32, #tpu.memory_space<vmem>>, vector<32x256xf32>
    %cst = arith.constant dense<0.000000e+00> : vector<8x256xf32>
    %3 = tpu.matmul %1, %2, %cst {dimension_numbers = #tpu.dot_dimension_numbers<[1], [0], [0], [1], [0, 0, 1, 1], [], []>} : vector<8x32xf32>, vector<32x256xf32>, vector<8x256xf32> -> vector<8x256xf32>
    %cst_4 = arith.constant 0.420448214 : f32
    %4 = vector.broadcast %cst_4 : f32 to vector<8x256xf32>
    %5 = arith.mulf %3, %4 : vector<8x256xf32>
    %c0_5 = arith.constant 0 : index
    %c0_6 = arith.constant 0 : index
    %6 = vector.load %arg3[%c0_5, %c0_6] : memref<32x256xf32, #tpu.memory_space<vmem>>, vector<32x256xf32>
    %cst_7 = arith.constant dense<0.000000e+00> : vector<8x256xf32>
    %7 = tpu.matmul %1, %6, %cst_7 {dimension_numbers = #tpu.dot_dimension_numbers<[1], [0], [0], [1], [0, 0, 1, 1], [], []>} : vector<8x32xf32>, vector<32x256xf32>, vector<8x256xf32> -> vector<8x256xf32>
    %cst_8 = arith.constant 0.420448214 : f32
    %8 = vector.broadcast %cst_8 : f32 to vector<8x256xf32>
    %9 = arith.mulf %7, %8 : vector<8x256xf32>
    %c0_9 = arith.constant 0 : index
    %c0_10 = arith.constant 0 : index
    %10 = vector.load %arg4[%c0_9, %c0_10] : memref<32x256xf32, #tpu.memory_space<vmem>>, vector<32x256xf32>
    %cst_11 = arith.constant dense<0.000000e+00> : vector<8x256xf32>
    %11 = tpu.matmul %1, %10, %cst_11 {dimension_numbers = #tpu.dot_dimension_numbers<[1], [0], [0], [1], [0, 0, 1, 1], [], []>} : vector<8x32xf32>, vector<32x256xf32>, vector<8x256xf32> -> vector<8x256xf32>
    %12 = vector.extract_strided_slice %5 {offsets = [0, 0], sizes = [8, 32], strides = [1, 1]} : vector<8x256xf32> to vector<8x32xf32>
    %13 = vector.extract_strided_slice %9 {offsets = [0, 0], sizes = [8, 32], strides = [1, 1]} : vector<8x256xf32> to vector<8x32xf32>
    %14 = vector.extract_strided_slice %11 {offsets = [0, 0], sizes = [8, 32], strides = [1, 1]} : vector<8x256xf32> to vector<8x32xf32>
    %cst_12 = arith.constant dense<0.000000e+00> : vector<8x8xf32>
    %15 = tpu.matmul %12, %13, %cst_12 {dimension_numbers = #tpu.dot_dimension_numbers<[1], [1], [0], [0], [0, 0, 1, 0], [], []>} : vector<8x32xf32>, vector<8x32xf32>, vector<8x8xf32> -> vector<8x8xf32>
    %cst_13 = arith.constant dense<0xFF800000> : vector<8xf32>
    %16 = vector.multi_reduction <maximumf>, %15, %cst_13 [1] : vector<8x8xf32> to vector<8xf32>
    %cst_14 = arith.constant 0xFF800000 : f32
    %17 = vector.broadcast %cst_14 : f32 to vector<8xf32>
    %18 = arith.maximumf %17, %16 : vector<8xf32>
    %19 = vector.shape_cast %18 : vector<8xf32> to vector<8x1xf32>
    %20 = vector.broadcast %19 : vector<8x1xf32> to vector<8x8xf32>
    %21 = arith.subf %15, %20 : vector<8x8xf32>
    %22 = math.exp %21 : vector<8x8xf32>
    %cst_15 = arith.constant dense<0.000000e+00> : vector<8xf32>
    %23 = vector.multi_reduction <add>, %22, %cst_15 [1] : vector<8x8xf32> to vector<8xf32>
    %24 = vector.shape_cast %23 : vector<8xf32> to vector<8x1xf32>
    %25 = vector.broadcast %24 : vector<8x1xf32> to vector<8x8xf32>
    %26 = arith.divf %22, %25 : vector<8x8xf32>
    %cst_16 = arith.constant dense<0.000000e+00> : vector<8x32xf32>
    %27 = tpu.matmul %26, %14, %cst_16 {dimension_numbers = #tpu.dot_dimension_numbers<[1], [0], [0], [1], [0, 0, 1, 1], [], []>} : vector<8x8xf32>, vector<8x32xf32>, vector<8x32xf32> -> vector<8x32xf32>
    %28 = vector.extract_strided_slice %5 {offsets = [0, 32], sizes = [8, 32], strides = [1, 1]} : vector<8x256xf32> to vector<8x32xf32>
    %29 = vector.extract_strided_slice %9 {offsets = [0, 32], sizes = [8, 32], strides = [1, 1]} : vector<8x256xf32> to vector<8x32xf32>
    %30 = vector.extract_strided_slice %11 {offsets = [0, 32], sizes = [8, 32], strides = [1, 1]} : vector<8x256xf32> to vector<8x32xf32>
    %cst_17 = arith.constant dense<0.000000e+00> : vector<8x8xf32>
    %31 = tpu.matmul %28, %29, %cst_17 {dimension_numbers = #tpu.dot_dimension_numbers<[1], [1], [0], [0], [0, 0, 1, 0], [], []>} : vector<8x32xf32>, vector<8x32xf32>, vector<8x8xf32> -> vector<8x8xf32>
    %cst_18 = arith.constant dense<0xFF800000> : vector<8xf32>
    %32 = vector.multi_reduction <maximumf>, %31, %cst_18 [1] : vector<8x8xf32> to vector<8xf32>
    %cst_19 = arith.constant 0xFF800000 : f32
    %33 = vector.broadcast %cst_19 : f32 to vector<8xf32>
    %34 = arith.maximumf %33, %32 : vector<8xf32>
    %35 = vector.shape_cast %34 : vector<8xf32> to vector<8x1xf32>
    %36 = vector.broadcast %35 : vector<8x1xf32> to vector<8x8xf32>
    %37 = arith.subf %31, %36 : vector<8x8xf32>
    %38 = math.exp %37 : vector<8x8xf32>
    %cst_20 = arith.constant dense<0.000000e+00> : vector<8xf32>
    %39 = vector.multi_reduction <add>, %38, %cst_20 [1] : vector<8x8xf32> to vector<8xf32>
    %40 = vector.shape_cast %39 : vector<8xf32> to vector<8x1xf32>
    %41 = vector.broadcast %40 : vector<8x1xf32> to vector<8x8xf32>
    %42 = arith.divf %38, %41 : vector<8x8xf32>
    %cst_21 = arith.constant dense<0.000000e+00> : vector<8x32xf32>
    %43 = tpu.matmul %42, %30, %cst_21 {dimension_numbers = #tpu.dot_dimension_numbers<[1], [0], [0], [1], [0, 0, 1, 1], [], []>} : vector<8x8xf32>, vector<8x32xf32>, vector<8x32xf32> -> vector<8x32xf32>
    %44 = vector.extract_strided_slice %5 {offsets = [0, 64], sizes = [8, 32], strides = [1, 1]} : vector<8x256xf32> to vector<8x32xf32>
    %45 = vector.extract_strided_slice %9 {offsets = [0, 64], sizes = [8, 32], strides = [1, 1]} : vector<8x256xf32> to vector<8x32xf32>
    %46 = vector.extract_strided_slice %11 {offsets = [0, 64], sizes = [8, 32], strides = [1, 1]} : vector<8x256xf32> to vector<8x32xf32>
    %cst_22 = arith.constant dense<0.000000e+00> : vector<8x8xf32>
    %47 = tpu.matmul %44, %45, %cst_22 {dimension_numbers = #tpu.dot_dimension_numbers<[1], [1], [0], [0], [0, 0, 1, 0], [], []>} : vector<8x32xf32>, vector<8x32xf32>, vector<8x8xf32> -> vector<8x8xf32>
    %cst_23 = arith.constant dense<0xFF800000> : vector<8xf32>
    %48 = vector.multi_reduction <maximumf>, %47, %cst_23 [1] : vector<8x8xf32> to vector<8xf32>
    %cst_24 = arith.constant 0xFF800000 : f32
    %49 = vector.broadcast %cst_24 : f32 to vector<8xf32>
    %50 = arith.maximumf %49, %48 : vector<8xf32>
    %51 = vector.shape_cast %50 : vector<8xf32> to vector<8x1xf32>
    %52 = vector.broadcast %51 : vector<8x1xf32> to vector<8x8xf32>
    %53 = arith.subf %47, %52 : vector<8x8xf32>
    %54 = math.exp %53 : vector<8x8xf32>
    %cst_25 = arith.constant dense<0.000000e+00> : vector<8xf32>
    %55 = vector.multi_reduction <add>, %54, %cst_25 [1] : vector<8x8xf32> to vector<8xf32>
    %56 = vector.shape_cast %55 : vector<8xf32> to vector<8x1xf32>
    %57 = vector.broadcast %56 : vector<8x1xf32> to vector<8x8xf32>
    %58 = arith.divf %54, %57 : vector<8x8xf32>
    %cst_26 = arith.constant dense<0.000000e+00> : vector<8x32xf32>
    %59 = tpu.matmul %58, %46, %cst_26 {dimension_numbers = #tpu.dot_dimension_numbers<[1], [0], [0], [1], [0, 0, 1, 1], [], []>} : vector<8x8xf32>, vector<8x32xf32>, vector<8x32xf32> -> vector<8x32xf32>
    %60 = vector.extract_strided_slice %5 {offsets = [0, 96], sizes = [8, 32], strides = [1, 1]} : vector<8x256xf32> to vector<8x32xf32>
    %61 = vector.extract_strided_slice %9 {offsets = [0, 96], sizes = [8, 32], strides = [1, 1]} : vector<8x256xf32> to vector<8x32xf32>
    %62 = vector.extract_strided_slice %11 {offsets = [0, 96], sizes = [8, 32], strides = [1, 1]} : vector<8x256xf32> to vector<8x32xf32>
    %cst_27 = arith.constant dense<0.000000e+00> : vector<8x8xf32>
    %63 = tpu.matmul %60, %61, %cst_27 {dimension_numbers = #tpu.dot_dimension_numbers<[1], [1], [0], [0], [0, 0, 1, 0], [], []>} : vector<8x32xf32>, vector<8x32xf32>, vector<8x8xf32> -> vector<8x8xf32>
    %cst_28 = arith.constant dense<0xFF800000> : vector<8xf32>
    %64 = vector.multi_reduction <maximumf>, %63, %cst_28 [1] : vector<8x8xf32> to vector<8xf32>
    %cst_29 = arith.constant 0xFF800000 : f32
    %65 = vector.broadcast %cst_29 : f32 to vector<8xf32>
    %66 = arith.maximumf %65, %64 : vector<8xf32>
    %67 = vector.shape_cast %66 : vector<8xf32> to vector<8x1xf32>
    %68 = vector.broadcast %67 : vector<8x1xf32> to vector<8x8xf32>
    %69 = arith.subf %63, %68 : vector<8x8xf32>
    %70 = math.exp %69 : vector<8x8xf32>
    %cst_30 = arith.constant dense<0.000000e+00> : vector<8xf32>
    %71 = vector.multi_reduction <add>, %70, %cst_30 [1] : vector<8x8xf32> to vector<8xf32>
    %72 = vector.shape_cast %71 : vector<8xf32> to vector<8x1xf32>
    %73 = vector.broadcast %72 : vector<8x1xf32> to vector<8x8xf32>
    %74 = arith.divf %70, %73 : vector<8x8xf32>
    %cst_31 = arith.constant dense<0.000000e+00> : vector<8x32xf32>
    %75 = tpu.matmul %74, %62, %cst_31 {dimension_numbers = #tpu.dot_dimension_numbers<[1], [0], [0], [1], [0, 0, 1, 1], [], []>} : vector<8x8xf32>, vector<8x32xf32>, vector<8x32xf32> -> vector<8x32xf32>
    %76 = vector.extract_strided_slice %5 {offsets = [0, 128], sizes = [8, 32], strides = [1, 1]} : vector<8x256xf32> to vector<8x32xf32>
    %77 = vector.extract_strided_slice %9 {offsets = [0, 128], sizes = [8, 32], strides = [1, 1]} : vector<8x256xf32> to vector<8x32xf32>
    %78 = vector.extract_strided_slice %11 {offsets = [0, 128], sizes = [8, 32], strides = [1, 1]} : vector<8x256xf32> to vector<8x32xf32>
    %cst_32 = arith.constant dense<0.000000e+00> : vector<8x8xf32>
    %79 = tpu.matmul %76, %77, %cst_32 {dimension_numbers = #tpu.dot_dimension_numbers<[1], [1], [0], [0], [0, 0, 1, 0], [], []>} : vector<8x32xf32>, vector<8x32xf32>, vector<8x8xf32> -> vector<8x8xf32>
    %cst_33 = arith.constant dense<0xFF800000> : vector<8xf32>
    %80 = vector.multi_reduction <maximumf>, %79, %cst_33 [1] : vector<8x8xf32> to vector<8xf32>
    %cst_34 = arith.constant 0xFF800000 : f32
    %81 = vector.broadcast %cst_34 : f32 to vector<8xf32>
    %82 = arith.maximumf %81, %80 : vector<8xf32>
    %83 = vector.shape_cast %82 : vector<8xf32> to vector<8x1xf32>
    %84 = vector.broadcast %83 : vector<8x1xf32> to vector<8x8xf32>
    %85 = arith.subf %79, %84 : vector<8x8xf32>
    %86 = math.exp %85 : vector<8x8xf32>
    %cst_35 = arith.constant dense<0.000000e+00> : vector<8xf32>
    %87 = vector.multi_reduction <add>, %86, %cst_35 [1] : vector<8x8xf32> to vector<8xf32>
    %88 = vector.shape_cast %87 : vector<8xf32> to vector<8x1xf32>
    %89 = vector.broadcast %88 : vector<8x1xf32> to vector<8x8xf32>
    %90 = arith.divf %86, %89 : vector<8x8xf32>
    %cst_36 = arith.constant dense<0.000000e+00> : vector<8x32xf32>
    %91 = tpu.matmul %90, %78, %cst_36 {dimension_numbers = #tpu.dot_dimension_numbers<[1], [0], [0], [1], [0, 0, 1, 1], [], []>} : vector<8x8xf32>, vector<8x32xf32>, vector<8x32xf32> -> vector<8x32xf32>
    %92 = vector.extract_strided_slice %5 {offsets = [0, 160], sizes = [8, 32], strides = [1, 1]} : vector<8x256xf32> to vector<8x32xf32>
    %93 = vector.extract_strided_slice %9 {offsets = [0, 160], sizes = [8, 32], strides = [1, 1]} : vector<8x256xf32> to vector<8x32xf32>
    %94 = vector.extract_strided_slice %11 {offsets = [0, 160], sizes = [8, 32], strides = [1, 1]} : vector<8x256xf32> to vector<8x32xf32>
    %cst_37 = arith.constant dense<0.000000e+00> : vector<8x8xf32>
    %95 = tpu.matmul %92, %93, %cst_37 {dimension_numbers = #tpu.dot_dimension_numbers<[1], [1], [0], [0], [0, 0, 1, 0], [], []>} : vector<8x32xf32>, vector<8x32xf32>, vector<8x8xf32> -> vector<8x8xf32>
    %cst_38 = arith.constant dense<0xFF800000> : vector<8xf32>
    %96 = vector.multi_reduction <maximumf>, %95, %cst_38 [1] : vector<8x8xf32> to vector<8xf32>
    %cst_39 = arith.constant 0xFF800000 : f32
    %97 = vector.broadcast %cst_39 : f32 to vector<8xf32>
    %98 = arith.maximumf %97, %96 : vector<8xf32>
    %99 = vector.shape_cast %98 : vector<8xf32> to vector<8x1xf32>
    %100 = vector.broadcast %99 : vector<8x1xf32> to vector<8x8xf32>
    %101 = arith.subf %95, %100 : vector<8x8xf32>
    %102 = math.exp %101 : vector<8x8xf32>
    %cst_40 = arith.constant dense<0.000000e+00> : vector<8xf32>
    %103 = vector.multi_reduction <add>, %102, %cst_40 [1] : vector<8x8xf32> to vector<8xf32>
    %104 = vector.shape_cast %103 : vector<8xf32> to vector<8x1xf32>
    %105 = vector.broadcast %104 : vector<8x1xf32> to vector<8x8xf32>
    %106 = arith.divf %102, %105 : vector<8x8xf32>
    %cst_41 = arith.constant dense<0.000000e+00> : vector<8x32xf32>
    %107 = tpu.matmul %106, %94, %cst_41 {dimension_numbers = #tpu.dot_dimension_numbers<[1], [0], [0], [1], [0, 0, 1, 1], [], []>} : vector<8x8xf32>, vector<8x32xf32>, vector<8x32xf32> -> vector<8x32xf32>
    %108 = vector.extract_strided_slice %5 {offsets = [0, 192], sizes = [8, 32], strides = [1, 1]} : vector<8x256xf32> to vector<8x32xf32>
    %109 = vector.extract_strided_slice %9 {offsets = [0, 192], sizes = [8, 32], strides = [1, 1]} : vector<8x256xf32> to vector<8x32xf32>
    %110 = vector.extract_strided_slice %11 {offsets = [0, 192], sizes = [8, 32], strides = [1, 1]} : vector<8x256xf32> to vector<8x32xf32>
    %cst_42 = arith.constant dense<0.000000e+00> : vector<8x8xf32>
    %111 = tpu.matmul %108, %109, %cst_42 {dimension_numbers = #tpu.dot_dimension_numbers<[1], [1], [0], [0], [0, 0, 1, 0], [], []>} : vector<8x32xf32>, vector<8x32xf32>, vector<8x8xf32> -> vector<8x8xf32>
    %cst_43 = arith.constant dense<0xFF800000> : vector<8xf32>
    %112 = vector.multi_reduction <maximumf>, %111, %cst_43 [1] : vector<8x8xf32> to vector<8xf32>
    %cst_44 = arith.constant 0xFF800000 : f32
    %113 = vector.broadcast %cst_44 : f32 to vector<8xf32>
    %114 = arith.maximumf %113, %112 : vector<8xf32>
    %115 = vector.shape_cast %114 : vector<8xf32> to vector<8x1xf32>
    %116 = vector.broadcast %115 : vector<8x1xf32> to vector<8x8xf32>
    %117 = arith.subf %111, %116 : vector<8x8xf32>
    %118 = math.exp %117 : vector<8x8xf32>
    %cst_45 = arith.constant dense<0.000000e+00> : vector<8xf32>
    %119 = vector.multi_reduction <add>, %118, %cst_45 [1] : vector<8x8xf32> to vector<8xf32>
    %120 = vector.shape_cast %119 : vector<8xf32> to vector<8x1xf32>
    %121 = vector.broadcast %120 : vector<8x1xf32> to vector<8x8xf32>
    %122 = arith.divf %118, %121 : vector<8x8xf32>
    %cst_46 = arith.constant dense<0.000000e+00> : vector<8x32xf32>
    %123 = tpu.matmul %122, %110, %cst_46 {dimension_numbers = #tpu.dot_dimension_numbers<[1], [0], [0], [1], [0, 0, 1, 1], [], []>} : vector<8x8xf32>, vector<8x32xf32>, vector<8x32xf32> -> vector<8x32xf32>
    %124 = vector.extract_strided_slice %5 {offsets = [0, 224], sizes = [8, 32], strides = [1, 1]} : vector<8x256xf32> to vector<8x32xf32>
    %125 = vector.extract_strided_slice %9 {offsets = [0, 224], sizes = [8, 32], strides = [1, 1]} : vector<8x256xf32> to vector<8x32xf32>
    %126 = vector.extract_strided_slice %11 {offsets = [0, 224], sizes = [8, 32], strides = [1, 1]} : vector<8x256xf32> to vector<8x32xf32>
    %cst_47 = arith.constant dense<0.000000e+00> : vector<8x8xf32>
    %127 = tpu.matmul %124, %125, %cst_47 {dimension_numbers = #tpu.dot_dimension_numbers<[1], [1], [0], [0], [0, 0, 1, 0], [], []>} : vector<8x32xf32>, vector<8x32xf32>, vector<8x8xf32> -> vector<8x8xf32>
    %cst_48 = arith.constant dense<0xFF800000> : vector<8xf32>
    %128 = vector.multi_reduction <maximumf>, %127, %cst_48 [1] : vector<8x8xf32> to vector<8xf32>
    %cst_49 = arith.constant 0xFF800000 : f32
    %129 = vector.broadcast %cst_49 : f32 to vector<8xf32>
    %130 = arith.maximumf %129, %128 : vector<8xf32>
    %131 = vector.shape_cast %130 : vector<8xf32> to vector<8x1xf32>
    %132 = vector.broadcast %131 : vector<8x1xf32> to vector<8x8xf32>
    %133 = arith.subf %127, %132 : vector<8x8xf32>
    %134 = math.exp %133 : vector<8x8xf32>
    %cst_50 = arith.constant dense<0.000000e+00> : vector<8xf32>
    %135 = vector.multi_reduction <add>, %134, %cst_50 [1] : vector<8x8xf32> to vector<8xf32>
    %136 = vector.shape_cast %135 : vector<8xf32> to vector<8x1xf32>
    %137 = vector.broadcast %136 : vector<8x1xf32> to vector<8x8xf32>
    %138 = arith.divf %134, %137 : vector<8x8xf32>
    %cst_51 = arith.constant dense<0.000000e+00> : vector<8x32xf32>
    %139 = tpu.matmul %138, %126, %cst_51 {dimension_numbers = #tpu.dot_dimension_numbers<[1], [0], [0], [1], [0, 0, 1, 1], [], []>} : vector<8x8xf32>, vector<8x32xf32>, vector<8x32xf32> -> vector<8x32xf32>
    %140 = tpu.concatenate %27, %43, %59, %75, %91, %107, %123, %139 in 1 : vector<8x32xf32>, vector<8x32xf32>, vector<8x32xf32>, vector<8x32xf32>, vector<8x32xf32>, vector<8x32xf32>, vector<8x32xf32>, vector<8x32xf32> -> vector<8x256xf32>
    %c0_52 = arith.constant 0 : index
    %c0_53 = arith.constant 0 : index
    %141 = vector.load %arg5[%c0_52, %c0_53] : memref<256x32xf32, #tpu.memory_space<vmem>>, vector<256x32xf32>
    %cst_54 = arith.constant dense<0.000000e+00> : vector<8x32xf32>
    %142 = tpu.matmul %140, %141, %cst_54 {dimension_numbers = #tpu.dot_dimension_numbers<[1], [0], [0], [1], [0, 0, 1, 1], [], []>} : vector<8x256xf32>, vector<256x32xf32>, vector<8x32xf32> -> vector<8x32xf32>
    %c0_55 = arith.constant 0 : index
    %c0_56 = arith.constant 0 : index
    %143 = vector.load %arg6[%c0_55, %c0_56] : memref<1x32xf32, #tpu.memory_space<vmem>>, vector<1x32xf32>
    %144 = vector.broadcast %143 : vector<1x32xf32> to vector<8x32xf32>
    %145 = arith.addf %142, %144 : vector<8x32xf32>
    %c0_57 = arith.constant 0 : index
    %c0_58 = arith.constant 0 : index
    %c0_59 = arith.constant 0 : index
    %146 = vector.load %arg7[%c0_57, %c0_58, %c0_59] : memref<1x8x32xf32, #tpu.memory_space<vmem>>, vector<1x8x32xf32>
    %147 = vector.shape_cast %146 : vector<1x8x32xf32> to vector<8x32xf32>
    %148 = vector.shape_cast %145 : vector<8x32xf32> to vector<1x8x32xf32>
    tpu.vector_store %arg7[%c0_57, %c0_58, %c0_59], %148 {strides = array<i32>} : memref<1x8x32xf32, #tpu.memory_space<vmem>>, vector<1x8x32xf32>,
    return
  }
  func.func @transform_0(%arg0: i32) -> (i32, i32, i32) {
    %c0_i32 = arith.constant 0 : i32
    %c0_i32_0 = arith.constant 0 : i32
    %c0_i32_1 = arith.constant 0 : i32
    return %arg0, %c0_i32, %c0_i32_0 : i32, i32, i32
  }
  func.func @transform_1(%arg0: i32) -> (i32, i32) {
    %c0_i32 = arith.constant 0 : i32
    %c0_i32_0 = arith.constant 0 : i32
    %c0_i32_1 = arith.constant 0 : i32
    return %c0_i32, %c0_i32_0 : i32, i32
  }
  func.func @transform_2(%arg0: i32) -> (i32, i32) {
    %c0_i32 = arith.constant 0 : i32
    %c0_i32_0 = arith.constant 0 : i32
    %c0_i32_1 = arith.constant 0 : i32
    return %c0_i32, %c0_i32_0 : i32, i32
  }
  func.func @transform_3(%arg0: i32) -> (i32, i32) {
    %c0_i32 = arith.constant 0 : i32
    %c0_i32_0 = arith.constant 0 : i32
    %c0_i32_1 = arith.constant 0 : i32
    return %c0_i32, %c0_i32_0 : i32, i32
  }
  func.func @transform_4(%arg0: i32) -> (i32, i32) {
    %c0_i32 = arith.constant 0 : i32
    %c0_i32_0 = arith.constant 0 : i32
    %c0_i32_1 = arith.constant 0 : i32
    return %c0_i32, %c0_i32_0 : i32, i32
  }
  func.func @transform_5(%arg0: i32) -> (i32, i32) {
    %c0_i32 = arith.constant 0 : i32
    %c0_i32_0 = arith.constant 0 : i32
    %c0_i32_1 = arith.constant 0 : i32
    return %c0_i32, %c0_i32_0 : i32, i32
  }
  func.func @transform_6(%arg0: i32) -> (i32, i32, i32) {
    %c0_i32 = arith.constant 0 : i32
    %c0_i32_0 = arith.constant 0 : i32
    %c0_i32_1 = arith.constant 0 : i32
    return %arg0, %c0_i32, %c0_i32_0 : i32, i32, i32
  }
}

</mosaic_0001>

<llo_original>
// kernel: tpu_custom_call.1
$region0: #{tpu_custom_call.1}
  #allocation0 [shape = 'u32[]', space=smem, size = 0x4, offset = 0x4, fixed_abs, tag = 'smem constant byte address 0x4 - core index']
  #allocation1 [shape = 'u32[144,128]{1,0:T(1,128)}', space=vmem, size = 0x12000, scoped, tag = 'internal scratch']
  %s0 = inlined_call_operand.vmem [shape: f32[2,8,32], index: 0, kind: input, shape index: {}]
  %s1 = inlined_call_operand.vmem [shape: f32[32,256], index: 1, kind: input, shape index: {}]
  %s2 = inlined_call_operand.vmem [shape: f32[32,256], index: 2, kind: input, shape index: {}]
  %s3 = inlined_call_operand.vmem [shape: f32[32,256], index: 3, kind: input, shape index: {}]
  %s4 = inlined_call_operand.vmem [shape: f32[256,32], index: 4, kind: input, shape index: {}]
  %s5 = inlined_call_operand.vmem [shape: f32[1,32], index: 5, kind: input, shape index: {}]
  %s6 = inlined_call_operand.hbm [shape: f32[2,8,32], index: 6, kind: output, shape index: {}]
  %s7 = sld [smem:[#allocation0]]
  $region57: #{tpu_custom_call.1} parent=0
    _
  %s9 = ssub.s32 1, %s7
  %s10 = scalar_select 0, %s9, %s7
  $region1: #{tpu_custom_call.1} parent=0
    #allocation2 [shape = 'u8[8192]{0}', space=vmem, size = 0x2000, scoped, tag = 'output window, operand 0']
    #allocation3 [shape = 's32[2]{0}', space=sflag, size = 0x8, scoped, tag = 'scoped memory for tpu_custom_call.1']
    %11 = vsyncpa [#allocation3], 0
    %s12 = scalar_lea.sflag [#allocation3], 1
    %13 = vsyncpa %s12, 0
    loop: start=0, step=1, limit=4
    $region2: #{tpu_custom_call.1} parent=1 // loop_pre_header
      _
    $region3: #{tpu_custom_call.1} parent=1 // loop_header
      %s15 = sphi 0, %s19
      %p16 = scmp.ge.s32.totalorder %s15, 4
      %s25 = sphi 0, %s27
      %s28 = sphi 0, %s25
      %s29 = sphi 0, %s28
      %s45 = sphi 0, %s29
      %s49 = sphi 0, %s49
      %s51 = sphi 0, %s49
      %s52 = sphi 0, %s51
      %s66 = sphi 0, %s52
      %s70 = sphi 0, %s70
      %s72 = sphi 0, %s70
      %s73 = sphi 0, %s72
      %s87 = sphi 0, %s73
      %s91 = sphi 0, %s91
      %s93 = sphi 0, %s91
      %s94 = sphi 0, %s93
      %s108 = sphi 0, %s94
      %s112 = sphi 0, %s112
      %s114 = sphi 0, %s112
      %s115 = sphi 0, %s114
      %s129 = sphi 0, %s115
      %s133 = sphi 0, %s133
      %s135 = sphi 0, %s133
      %s136 = sphi 0, %s135
      %s150 = sphi 0, %s136
      %s156 = sphi 0, %s158
      %s159 = sphi 0, %s156
      %s160 = sphi 0, %s159
      %s176 = sphi 0, %s160
    $region4: #{tpu_custom_call.1} parent=1 // loop_header_branch
      %18 = sbr.rel (%p16) target = $region8
    $region5: #{tpu_custom_call.1} parent=1 // loop_body
      %s20 = ssub.s32 %s15, 1
      %s21 = ssub.s32 %s15, 2
      %s22 = sadd.s32 %s15, 1
      %s23 = ssub.s32 %s15, %s22
      %p24 = scmp.eq.s32.totalorder %s23, 0
      %s26 = sadd.s32 %s25, 1
      %s27 = scalar_select %p24, %s25, %s26
      %p30 = pneg %p24
      %p31 = scmp.eq.s32.totalorder %s15, 1
      %p32 = por %p30, %p31
      %p33 = scmp.ne.s32.totalorder %s25, %s28
      %p34 = scmp.eq.s32.totalorder %s15, 0
      %p35 = por %p33, %p34
      %p36 = scmp.ne.s32.totalorder %s25, %s28
      %p37 = scmp.eq.s32.totalorder %s20, 1
      %p38 = por %p36, %p37
      %p39 = scmp.ne.s32.totalorder %s28, %s29
      %p40 = scmp.eq.s32.totalorder %s20, 0
      %p41 = por %p39, %p40
      %p42 = scmp.ne.s32.totalorder %s28, %s29
      %p43 = scmp.eq.s32.totalorder %s21, 1
      %p44 = por %p42, %p43
      %p46 = scmp.ne.s32.totalorder %s29, %s45
      %p47 = scmp.eq.s32.totalorder %s21, 0
      %p48 = por %p46, %p47
      %s50 = sadd.s32 %s49, 1
      %p53 = scmp.eq.s32.totalorder %s15, 1
      %p54 = scmp.ne.s32.totalorder %s49, %s51
      %p55 = scmp.eq.s32.totalorder %s15, 0
      %p56 = por %p54, %p55
      %p57 = scmp.ne.s32.totalorder %s49, %s51
      %p58 = scmp.eq.s32.totalorder %s20, 1
      %p59 = por %p57, %p58
      %p60 = scmp.ne.s32.totalorder %s51, %s52
      %p61 = scmp.eq.s32.totalorder %s20, 0
      %p62 = por %p60, %p61
      %p63 = scmp.ne.s32.totalorder %s51, %s52
      %p64 = scmp.eq.s32.totalorder %s21, 1
      %p65 = por %p63, %p64
      %p67 = scmp.ne.s32.totalorder %s52, %s66
      %p68 = scmp.eq.s32.totalorder %s21, 0
      %p69 = por %p67, %p68
      %s71 = sadd.s32 %s70, 1
      %p74 = scmp.eq.s32.totalorder %s15, 1
      %p75 = scmp.ne.s32.totalorder %s70, %s72
      %p76 = scmp.eq.s32.totalorder %s15, 0
      %p77 = por %p75, %p76
      %p78 = scmp.ne.s32.totalorder %s70, %s72
      %p79 = scmp.eq.s32.totalorder %s20, 1
      %p80 = por %p78, %p79
      %p81 = scmp.ne.s32.totalorder %s72, %s73
      %p82 = scmp.eq.s32.totalorder %s20, 0
      %p83 = por %p81, %p82
      %p84 = scmp.ne.s32.totalorder %s72, %s73
      %p85 = scmp.eq.s32.totalorder %s21, 1
      %p86 = por %p84, %p85
      %p88 = scmp.ne.s32.totalorder %s73, %s87
      %p89 = scmp.eq.s32.totalorder %s21, 0
      %p90 = por %p88, %p89
      %s92 = sadd.s32 %s91, 1
      %p95 = scmp.eq.s32.totalorder %s15, 1
      %p96 = scmp.ne.s32.totalorder %s91, %s93
      %p97 = scmp.eq.s32.totalorder %s15, 0
      %p98 = por %p96, %p97
      %p99 = scmp.ne.s32.totalorder %s91, %s93
      %p100 = scmp.eq.s32.totalorder %s20, 1
      %p101 = por %p99, %p100
      %p102 = scmp.ne.s32.totalorder %s93, %s94
      %p103 = scmp.eq.s32.totalorder %s20, 0
      %p104 = por %p102, %p103
      %p105 = scmp.ne.s32.totalorder %s93, %s94
      %p106 = scmp.eq.s32.totalorder %s21, 1
      %p107 = por %p105, %p106
      %p109 = scmp.ne.s32.totalorder %s94, %s108
      %p110 = scmp.eq.s32.totalorder %s21, 0
      %p111 = por %p109, %p110
      %s113 = sadd.s32 %s112, 1
      %p116 = scmp.eq.s32.totalorder %s15, 1
      %p117 = scmp.ne.s32.totalorder %s112, %s114
      %p118 = scmp.eq.s32.totalorder %s15, 0
      %p119 = por %p117, %p118
      %p120 = scmp.ne.s32.totalorder %s112, %s114
      %p121 = scmp.eq.s32.totalorder %s20, 1
      %p122 = por %p120, %p121
      %p123 = scmp.ne.s32.totalorder %s114, %s115
      %p124 = scmp.eq.s32.totalorder %s20, 0
      %p125 = por %p123, %p124
      %p126 = scmp.ne.s32.totalorder %s114, %s115
      %p127 = scmp.eq.s32.totalorder %s21, 1
      %p128 = por %p126, %p127
      %p130 = scmp.ne.s32.totalorder %s115, %s129
      %p131 = scmp.eq.s32.totalorder %s21, 0
      %p132 = por %p130, %p131
      %s134 = sadd.s32 %s133, 1
      %p137 = scmp.eq.s32.totalorder %s15, 1
      %p138 = scmp.ne.s32.totalorder %s133, %s135
      %p139 = scmp.eq.s32.totalorder %s15, 0
      %p140 = por %p138, %p139
      %p141 = scmp.ne.s32.totalorder %s133, %s135
      %p142 = scmp.eq.s32.totalorder %s20, 1
      %p143 = por %p141, %p142
      %p144 = scmp.ne.s32.totalorder %s135, %s136
      %p145 = scmp.eq.s32.totalorder %s20, 0
      %p146 = por %p144, %p145
      %p147 = scmp.ne.s32.totalorder %s135, %s136
      %p148 = scmp.eq.s32.totalorder %s21, 1
      %p149 = por %p147, %p148
      %p151 = scmp.ne.s32.totalorder %s136, %s150
      %p152 = scmp.eq.s32.totalorder %s21, 0
      %p153 = por %p151, %p152
      %s154 = ssub.s32 %s15, %s22
      %p155 = scmp.eq.s32.totalorder %s154, 0
      %s157 = sadd.s32 %s156, 1
      %s158 = scalar_select %p155, %s156, %s157
      %p161 = pneg %p155
      %p162 = scmp.eq.s32.totalorder %s15, 1
      %p163 = por %p161, %p162
      %p164 = scmp.ne.s32.totalorder %s156, %s159
      %p165 = scmp.eq.s32.totalorder %s15, 0
      %p166 = por %p164, %p165
      %p167 = scmp.ne.s32.totalorder %s156, %s159
      %p168 = scmp.eq.s32.totalorder %s20, 1
      %p169 = por %p167, %p168
      %p170 = scmp.ne.s32.totalorder %s159, %s160
      %p171 = scmp.eq.s32.totalorder %s20, 0
      %p172 = por %p170, %p171
      %p173 = scmp.ne.s32.totalorder %s159, %s160
      %p174 = scmp.eq.s32.totalorder %s21, 1
      %p175 = por %p173, %p174
      %p177 = scmp.ne.s32.totalorder %s160, %s176
      %p178 = scmp.eq.s32.totalorder %s21, 0
      %p179 = por %p177, %p178
      %p180 = scmp.le.s32.totalorder 1, %s15
      %p181 = scmp.lt.s32.totalorder %s15, 3
      %p182 = pnand %p180, %p181
      %p183 = pneg %p182
      // Predicated region
      $region9: #{tpu_custom_call.1} parent=5 // pred_check
        _
      $region10: #{tpu_custom_call.1} parent=5 // pred_check_branch
        %185 = sbr.rel (%p182) target = $region12
      $region11: #{tpu_custom_call.1} parent=5 // pred_region
        %s186 = ssub.s32 %s15, 1
        // Predicated region
        $region13: #{tpu_custom_call.1} parent=11 // pred_check
          %p187 = pneg %p62
        $region14: #{tpu_custom_call.1} parent=11 // pred_check_branch
          %189 = sbr.rel (%p187) target = $region16
        $region15: #{tpu_custom_call.1} parent=11 // pred_region
          _
        $region16: #{tpu_custom_call.1} parent=11 // pred_fallthru
          _
        // Predicated region
        $region17: #{tpu_custom_call.1} parent=11 // pred_check
          %p190 = pneg %p83
        $region18: #{tpu_custom_call.1} parent=11 // pred_check_branch
          %192 = sbr.rel (%p190) target = $region20
        $region19: #{tpu_custom_call.1} parent=11 // pred_region
          _
        $region20: #{tpu_custom_call.1} parent=11 // pred_fallthru
          _
        // Predicated region
        $region21: #{tpu_custom_call.1} parent=11 // pred_check
          %p193 = pneg %p104
        $region22: #{tpu_custom_call.1} parent=11 // pred_check_branch
          %195 = sbr.rel (%p193) target = $region24
        $region23: #{tpu_custom_call.1} parent=11 // pred_region
          _
        $region24: #{tpu_custom_call.1} parent=11 // pred_fallthru
          _
        // Predicated region
        $region25: #{tpu_custom_call.1} parent=11 // pred_check
          %p196 = pneg %p125
        $region26: #{tpu_custom_call.1} parent=11 // pred_check_branch
          %198 = sbr.rel (%p196) target = $region28
        $region27: #{tpu_custom_call.1} parent=11 // pred_region
          _
        $region28: #{tpu_custom_call.1} parent=11 // pred_fallthru
          _
        // Predicated region
        $region29: #{tpu_custom_call.1} parent=11 // pred_check
          %p199 = pneg %p146
        $region30: #{tpu_custom_call.1} parent=11 // pred_check_branch
          %201 = sbr.rel (%p199) target = $region32
        $region31: #{tpu_custom_call.1} parent=11 // pred_region
          _
        $region32: #{tpu_custom_call.1} parent=11 // pred_fallthru
          _
      $region12: #{tpu_custom_call.1} parent=5 // pred_fallthru
        _
      %p202 = scmp.lt.s32.totalorder %s15, 2
      // Predicated region
      $region33: #{tpu_custom_call.1} parent=5 // pred_check
        %p203 = pneg %p202
      $region34: #{tpu_custom_call.1} parent=5 // pred_check_branch
        %205 = sbr.rel (%p203) target = $region36
      $region35: #{tpu_custom_call.1} parent=5 // pred_region
        // Predicated region
        $region37: #{tpu_custom_call.1} parent=35 // pred_check
          %p206 = pneg %p35
        $region38: #{tpu_custom_call.1} parent=35 // pred_check_branch
          %208 = sbr.rel (%p206) target = $region40
        $region39: #{tpu_custom_call.1} parent=35 // pred_region
          %p209 = scmp.lt.s32.totalorder %s15, 1
          %s210 = scalar_select %p209, %s15, 1
          %s211 = smul.addr %s210, 8
          %s212 = scalar_lea.vmem %s0, %s211
        $region40: #{tpu_custom_call.1} parent=35 // pred_fallthru
          _
      $region36: #{tpu_custom_call.1} parent=5 // pred_fallthru
        _
      %p213 = scmp.le.s32.totalorder 1, %s15
      %p214 = scmp.lt.s32.totalorder %s15, 3
      %p215 = pnand %p213, %p214
      %p216 = pneg %p215
      // Predicated region
      $region41: #{tpu_custom_call.1} parent=5 // pred_check
        _
      $region42: #{tpu_custom_call.1} parent=5 // pred_check_branch
        %218 = sbr.rel (%p215) target = $region44
      $region43: #{tpu_custom_call.1} parent=5 // pred_region
        %s219 = ssub.s32 %s15, 1
        %p220 = scmp.lt.s32.totalorder %s20, 1
        %s221 = scalar_select %p220, %s20, 1
        %s222 = smul.addr %s221, 8
        %s223 = scalar_lea.vmem %s0, %s222
        %p224 = pneg %p41
        %p225 = pneg %p38
        %p226 = pneg %p62
        %p227 = pneg %p59
        %p228 = pneg %p83
        %p229 = pneg %p80
        %p230 = pneg %p104
        %p231 = pneg %p101
        %p232 = pneg %p125
        %p233 = pneg %p122
        %p234 = pneg %p146
        %p235 = pneg %p143
        %p236 = pneg %p172
        %p237 = pneg %p169
        %s238 = sand.u32 %s159, 1
        %s239 = scalar_lea.sflag [#allocation3], %s238
        %s240 = sand.u32 %s159, 1
        %s241 = smul.addr %s240, 8
        %s242 = scalar_lea.vmem [#allocation2], %s241
        %p243 = scmp.lt.s32.totalorder %s20, 1
        %s244 = scalar_select %p243, %s20, 1
        %s245 = smul.addr %s244, 8
        %s246 = scalar_lea.vmem %s0, %s245
        %v247 = vld [vmem:[%s246] sm:$0xff]
        %v248 = vld [vmem:[%s1] sm:$0xff]
        %v249 = vld [vmem:[%s1 + $0x8] sm:$0xff]
        %v250 = vld [vmem:[%s1 + $0x10] sm:$0xff]
        %v251 = vld [vmem:[%s1 + $0x18] sm:$0xff]
        %v252 = vld [vmem:[%s1 + $0x20] sm:$0xff]
        %v253 = vld [vmem:[%s1 + $0x28] sm:$0xff]
        %v254 = vld [vmem:[%s1 + $0x30] sm:$0xff]
        %v255 = vld [vmem:[%s1 + $0x38] sm:$0xff]
        %vm256 = vcmask 261120
        %v258 = vsel %vm256, %v247, 0
        %260 = vmatprep.subr.mxu0 0.0
        %261 = vmatpush1.msra.mxu0 0.0
        %262 = vmatprep.subr.mxu0 0.0
        %263 = vmatpush1.msra.mxu0 0.0
        %264 = vmatprep.subr.mxu0 0.0
        %265 = vmatpush1.msra.mxu0 0.0
        %266 = vmatprep.subr.mxu0 0.0
        %267 = vmatpush1.msra.mxu0 0.0
        %268 = vmatprep.subr.mxu0 0.0
        %269 = vmatpush1.msra.mxu0 0.0
        %270 = vmatprep.subr.mxu0 0.0
        %271 = vmatpush1.msra.mxu0 0.0
        %272 = vmatprep.subr.mxu0 0.0
        %273 = vmatpush1.msra.mxu0 0.0
        %274 = vmatprep.subr.mxu0 0.0
        %275 = vmatpush1.msra.mxu0 0.0
        %276 = vmatprep.subr.mxu0 0.0
        %277 = vmatpush1.msra.mxu0 0.0
        %278 = vmatprep.subr.mxu0 0.0
        %279 = vmatpush1.msra.mxu0 0.0
        %280 = vmatprep.subr.mxu0 0.0
        %281 = vmatpush1.msra.mxu0 0.0
        %282 = vmatprep.subr.mxu0 0.0
        %283 = vmatpush1.msra.mxu0 0.0
        %284 = vmatprep.subr.mxu0 %v255
        %285 = vmatpush1.msra.mxu0 %v254
        %286 = vmatprep.subr.mxu0 %v253
        %287 = vmatpush1.msra.mxu0 %v252
        %288 = vmatprep.subr.mxu0 %v251
        %289 = vmatpush1.msra.mxu0 %v250
        %290 = vmatprep.subr.mxu0 %v249
        %291 = vmatpush1.msra.mxu0 %v248
        %292 = vmatprep.subr.mxu0 0.0
        %293 = vmatpush2.msra.mxu0 0.0
        %294 = vmatprep.subr.mxu0 0.0
        %295 = vmatpush2.msra.mxu0 0.0
        %296 = vmatprep.subr.mxu0 0.0
        %297 = vmatpush2.msra.mxu0 0.0
        %298 = vmatprep.subr.mxu0 0.0
        %299 = vmatpush2.msra.mxu0 0.0
        %300 = vmatprep.subr.mxu0 0.0
        %301 = vmatpush2.msra.mxu0 0.0
        %302 = vmatprep.subr.mxu0 0.0
        %303 = vmatpush2.msra.mxu0 0.0
        %304 = vmatprep.subr.mxu0 0.0
        %305 = vmatpush2.msra.mxu0 0.0
        %306 = vmatprep.subr.mxu0 0.0
        %307 = vmatpush2.msra.mxu0 0.0
        %308 = vmatprep.subr.mxu0 0.0
        %309 = vmatpush2.msra.mxu0 0.0
        %310 = vmatprep.subr.mxu0 0.0
        %311 = vmatpush2.msra.mxu0 0.0
        %312 = vmatprep.subr.mxu0 0.0
        %313 = vmatpush2.msra.mxu0 0.0
        %314 = vmatprep.subr.mxu0 0.0
        %315 = vmatpush2.msra.mxu0 0.0
        %316 = vmatprep.subr.mxu0 0.0
        %317 = vmatpush2.msra.mxu0 0.0
        %318 = vmatprep.subr.mxu0 0.0
        %319 = vmatpush2.msra.mxu0 0.0
        %320 = vmatprep.subr.mxu0 0.0
        %321 = vmatpush2.msra.mxu0 0.0
        %322 = vmatprep.subr.mxu0 0.0
        %323 = vmatpush2.msra.mxu0 0.0
        %324 = vmatprep.mubr.f32.mxu0 0.0
        %325 = vmatmul.mubr.f32.gmra.mxu0 %v258
        %v326 = vpop.f32.mrf.mxu0
        %v327 = vadd.f32 0.0, %v326
        %v328 = vpop.f32.mrf.mxu0
        %v329 = vadd.f32 0.0, %v328
        %330 = vdwg.mxu0
        %v331 = vmul.f32 %v327, 0.4204482
        %v332 = vmul.f32 %v329, 0.4204482
        %v333 = vld [vmem:[%s2] sm:$0xff]
        %v334 = vld [vmem:[%s2 + $0x8] sm:$0xff]
        %v335 = vld [vmem:[%s2 + $0x10] sm:$0xff]
        %v336 = vld [vmem:[%s2 + $0x18] sm:$0xff]
        %v337 = vld [vmem:[%s2 + $0x20] sm:$0xff]
        %v338 = vld [vmem:[%s2 + $0x28] sm:$0xff]
        %v339 = vld [vmem:[%s2 + $0x30] sm:$0xff]
        %v340 = vld [vmem:[%s2 + $0x38] sm:$0xff]
        %341 = vmatprep.subr.mxu0 0.0
        %342 = vmatpush1.msra.mxu0 0.0
        %343 = vmatprep.subr.mxu0 0.0
        %344 = vmatpush1.msra.mxu0 0.0
        %345 = vmatprep.subr.mxu0 0.0
        %346 = vmatpush1.msra.mxu0 0.0
        %347 = vmatprep.subr.mxu0 0.0
        %348 = vmatpush1.msra.mxu0 0.0
        %349 = vmatprep.subr.mxu0 0.0
        %350 = vmatpush1.msra.mxu0 0.0
        %351 = vmatprep.subr.mxu0 0.0
        %352 = vmatpush1.msra.mxu0 0.0
        %353 = vmatprep.subr.mxu0 0.0
        %354 = vmatpush1.msra.mxu0 0.0
        %355 = vmatprep.subr.mxu0 0.0
        %356 = vmatpush1.msra.mxu0 0.0
        %357 = vmatprep.subr.mxu0 0.0
        %358 = vmatpush1.msra.mxu0 0.0
        %359 = vmatprep.subr.mxu0 0.0
        %360 = vmatpush1.msra.mxu0 0.0
        %361 = vmatprep.subr.mxu0 0.0
        %362 = vmatpush1.msra.mxu0 0.0
        %363 = vmatprep.subr.mxu0 0.0
        %364 = vmatpush1.msra.mxu0 0.0
        %365 = vmatprep.subr.mxu0 %v340
        %366 = vmatpush1.msra.mxu0 %v339
        %367 = vmatprep.subr.mxu0 %v338
        %368 = vmatpush1.msra.mxu0 %v337
        %369 = vmatprep.subr.mxu0 %v336
        %370 = vmatpush1.msra.mxu0 %v335
        %371 = vmatprep.subr.mxu0 %v334
        %372 = vmatpush1.msra.mxu0 %v333
        %373 = vmatprep.subr.mxu0 0.0
        %374 = vmatpush2.msra.mxu0 0.0
        %375 = vmatprep.subr.mxu0 0.0
        %376 = vmatpush2.msra.mxu0 0.0
        %377 = vmatprep.subr.mxu0 0.0
        %378 = vmatpush2.msra.mxu0 0.0
        %379 = vmatprep.subr.mxu0 0.0
        %380 = vmatpush2.msra.mxu0 0.0
        %381 = vmatprep.subr.mxu0 0.0
        %382 = vmatpush2.msra.mxu0 0.0
        %383 = vmatprep.subr.mxu0 0.0
        %384 = vmatpush2.msra.mxu0 0.0
        %385 = vmatprep.subr.mxu0 0.0
        %386 = vmatpush2.msra.mxu0 0.0
        %387 = vmatprep.subr.mxu0 0.0
        %388 = vmatpush2.msra.mxu0 0.0
        %389 = vmatprep.subr.mxu0 0.0
        %390 = vmatpush2.msra.mxu0 0.0
        %391 = vmatprep.subr.mxu0 0.0
        %392 = vmatpush2.msra.mxu0 0.0
        %393 = vmatprep.subr.mxu0 0.0
        %394 = vmatpush2.msra.mxu0 0.0
        %395 = vmatprep.subr.mxu0 0.0
        %396 = vmatpush2.msra.mxu0 0.0
        %397 = vmatprep.subr.mxu0 0.0
        %398 = vmatpush2.msra.mxu0 0.0
        %399 = vmatprep.subr.mxu0 0.0
        %400 = vmatpush2.msra.mxu0 0.0
        %401 = vmatprep.subr.mxu0 0.0
        %402 = vmatpush2.msra.mxu0 0.0
        %403 = vmatprep.subr.mxu0 0.0
        %404 = vmatpush2.msra.mxu0 0.0
        %405 = vmatprep.mubr.f32.mxu0 0.0
        %406 = vmatmul.mubr.f32.gmra.mxu0 %v258
        %v407 = vpop.f32.mrf.mxu0
        %v408 = vadd.f32 0.0, %v407
        %v409 = vpop.f32.mrf.mxu0
        %v410 = vadd.f32 0.0, %v409
        %411 = vdwg.mxu0
        %v412 = vmul.f32 %v408, 0.4204482
        %v413 = vmul.f32 %v410, 0.4204482
        %v414 = vld [vmem:[%s3] sm:$0xff]
        %v415 = vld [vmem:[%s3 + $0x8] sm:$0xff]
        %v416 = vld [vmem:[%s3 + $0x10] sm:$0xff]
        %v417 = vld [vmem:[%s3 + $0x18] sm:$0xff]
        %v418 = vld [vmem:[%s3 + $0x20] sm:$0xff]
        %v419 = vld [vmem:[%s3 + $0x28] sm:$0xff]
        %v420 = vld [vmem:[%s3 + $0x30] sm:$0xff]
        %v421 = vld [vmem:[%s3 + $0x38] sm:$0xff]
        %422 = vmatprep.subr.mxu0 0.0
        %423 = vmatpush1.msra.mxu0 0.0
        %424 = vmatprep.subr.mxu0 0.0
        %425 = vmatpush1.msra.mxu0 0.0
        %426 = vmatprep.subr.mxu0 0.0
        %427 = vmatpush1.msra.mxu0 0.0
        %428 = vmatprep.subr.mxu0 0.0
        %429 = vmatpush1.msra.mxu0 0.0
        %430 = vmatprep.subr.mxu0 0.0
        %431 = vmatpush1.msra.mxu0 0.0
        %432 = vmatprep.subr.mxu0 0.0
        %433 = vmatpush1.msra.mxu0 0.0
        %434 = vmatprep.subr.mxu0 0.0
        %435 = vmatpush1.msra.mxu0 0.0
        %436 = vmatprep.subr.mxu0 0.0
        %437 = vmatpush1.msra.mxu0 0.0
        %438 = vmatprep.subr.mxu0 0.0
        %439 = vmatpush1.msra.mxu0 0.0
        %440 = vmatprep.subr.mxu0 0.0
        %441 = vmatpush1.msra.mxu0 0.0
        %442 = vmatprep.subr.mxu0 0.0
        %443 = vmatpush1.msra.mxu0 0.0
        %444 = vmatprep.subr.mxu0 0.0
        %445 = vmatpush1.msra.mxu0 0.0
        %446 = vmatprep.subr.mxu0 %v421
        %447 = vmatpush1.msra.mxu0 %v420
        %448 = vmatprep.subr.mxu0 %v419
        %449 = vmatpush1.msra.mxu0 %v418
        %450 = vmatprep.subr.mxu0 %v417
        %451 = vmatpush1.msra.mxu0 %v416
        %452 = vmatprep.subr.mxu0 %v415
        %453 = vmatpush1.msra.mxu0 %v414
        %454 = vmatprep.subr.mxu0 0.0
        %455 = vmatpush2.msra.mxu0 0.0
        %456 = vmatprep.subr.mxu0 0.0
        %457 = vmatpush2.msra.mxu0 0.0
        %458 = vmatprep.subr.mxu0 0.0
        %459 = vmatpush2.msra.mxu0 0.0
        %460 = vmatprep.subr.mxu0 0.0
        %461 = vmatpush2.msra.mxu0 0.0
        %462 = vmatprep.subr.mxu0 0.0
        %463 = vmatpush2.msra.mxu0 0.0
        %464 = vmatprep.subr.mxu0 0.0
        %465 = vmatpush2.msra.mxu0 0.0
        %466 = vmatprep.subr.mxu0 0.0
        %467 = vmatpush2.msra.mxu0 0.0
        %468 = vmatprep.subr.mxu0 0.0
        %469 = vmatpush2.msra.mxu0 0.0
        %470 = vmatprep.subr.mxu0 0.0
        %471 = vmatpush2.msra.mxu0 0.0
        %472 = vmatprep.subr.mxu0 0.0
        %473 = vmatpush2.msra.mxu0 0.0
        %474 = vmatprep.subr.mxu0 0.0
        %475 = vmatpush2.msra.mxu0 0.0
        %476 = vmatprep.subr.mxu0 0.0
        %477 = vmatpush2.msra.mxu0 0.0
        %478 = vmatprep.subr.mxu0 0.0
        %479 = vmatpush2.msra.mxu0 0.0
        %480 = vmatprep.subr.mxu0 0.0
        %481 = vmatpush2.msra.mxu0 0.0
        %482 = vmatprep.subr.mxu0 0.0
        %483 = vmatpush2.msra.mxu0 0.0
        %484 = vmatprep.subr.mxu0 0.0
        %485 = vmatpush2.msra.mxu0 0.0
        %486 = vmatprep.mubr.f32.mxu0 0.0
        %487 = vmatmul.mubr.f32.gmra.mxu0 %v258
        %v488 = vpop.f32.mrf.mxu0
        %v489 = vadd.f32 0.0, %v488
        %v490 = vpop.f32.mrf.mxu0
        %v491 = vadd.f32 0.0, %v490
        %492 = vdwg.mxu0
        %v494 = vsel %vm256, %v331, 0
        %v497 = vsel %vm256, %v412, 0
        %499 = vmatprep.subr.mxu0 0.0
        %500 = vmatpush1.xpose.msra.mxu0 0.0
        %501 = vmatprep.subr.mxu0 0.0
        %502 = vmatpush1.xpose.msra.mxu0 0.0
        %503 = vmatprep.subr.mxu0 0.0
        %504 = vmatpush1.xpose.msra.mxu0 0.0
        %505 = vmatprep.subr.mxu0 0.0
        %506 = vmatpush1.xpose.msra.mxu0 0.0
        %507 = vmatprep.subr.mxu0 0.0
        %508 = vmatpush1.xpose.msra.mxu0 0.0
        %509 = vmatprep.subr.mxu0 0.0
        %510 = vmatpush1.xpose.msra.mxu0 0.0
        %511 = vmatprep.subr.mxu0 0.0
        %512 = vmatpush1.xpose.msra.mxu0 0.0
        %513 = vmatprep.subr.mxu0 0.0
        %514 = vmatpush1.xpose.msra.mxu0 0.0
        %515 = vmatprep.subr.mxu0 0.0
        %516 = vmatpush1.xpose.msra.mxu0 0.0
        %517 = vmatprep.subr.mxu0 0.0
        %518 = vmatpush1.xpose.msra.mxu0 0.0
        %519 = vmatprep.subr.mxu0 0.0
        %520 = vmatpush1.xpose.msra.mxu0 0.0
        %521 = vmatprep.subr.mxu0 0.0
        %522 = vmatpush1.xpose.msra.mxu0 0.0
        %523 = vmatprep.subr.mxu0 0.0
        %524 = vmatpush1.xpose.msra.mxu0 0.0
        %525 = vmatprep.subr.mxu0 0.0
        %526 = vmatpush1.xpose.msra.mxu0 0.0
        %527 = vmatprep.subr.mxu0 0.0
        %528 = vmatpush1.xpose.msra.mxu0 0.0
        %529 = vmatprep.subr.mxu0 0.0
        %530 = vmatpush1.xpose.msra.mxu0 %v497
        %531 = vmatprep.subr.mxu0 0.0
        %532 = vmatpush2.xpose.msra.mxu0 0.0
        %533 = vmatprep.subr.mxu0 0.0
        %534 = vmatpush2.xpose.msra.mxu0 0.0
        %535 = vmatprep.subr.mxu0 0.0
        %536 = vmatpush2.xpose.msra.mxu0 0.0
        %537 = vmatprep.subr.mxu0 0.0
        %538 = vmatpush2.xpose.msra.mxu0 0.0
        %539 = vmatprep.subr.mxu0 0.0
        %540 = vmatpush2.xpose.msra.mxu0 0.0
        %541 = vmatprep.subr.mxu0 0.0
        %542 = vmatpush2.xpose.msra.mxu0 0.0
        %543 = vmatprep.subr.mxu0 0.0
        %544 = vmatpush2.xpose.msra.mxu0 0.0
        %545 = vmatprep.subr.mxu0 0.0
        %546 = vmatpush2.xpose.msra.mxu0 0.0
        %547 = vmatprep.subr.mxu0 0.0
        %548 = vmatpush2.xpose.msra.mxu0 0.0
        %549 = vmatprep.subr.mxu0 0.0
        %550 = vmatpush2.xpose.msra.mxu0 0.0
        %551 = vmatprep.subr.mxu0 0.0
        %552 = vmatpush2.xpose.msra.mxu0 0.0
        %553 = vmatprep.subr.mxu0 0.0
        %554 = vmatpush2.xpose.msra.mxu0 0.0
        %555 = vmatprep.subr.mxu0 0.0
        %556 = vmatpush2.xpose.msra.mxu0 0.0
        %557 = vmatprep.subr.mxu0 0.0
        %558 = vmatpush2.xpose.msra.mxu0 0.0
        %559 = vmatprep.subr.mxu0 0.0
        %560 = vmatpush2.xpose.msra.mxu0 0.0
        %561 = vmatprep.subr.mxu0 0.0
        %562 = vmatpush2.xpose.msra.mxu0 0.0
        %563 = vmatprep.mubr.f32.mxu0 0.0
        %564 = vmatmul.mubr.f32.gmra.mxu0 %v494
        %v565 = vpop.f32.mrf.mxu0
        %v566 = vadd.f32 0.0, %v565
        %v567 = vpop.f32.mrf.mxu0
        %568 = vdwg.mxu0
        %vm569 = vcmask 64512
        %v570 = vsel %vm569, %v566, -inf
        %571 = vmax.xlane.f32.xlu0 %v570
        %v572 = vpop.xlane.xlu0 %571
        %v573 = vsub.f32 %v566, %v572
        %v574 = vmul.f32 %v573, 1.442695
        %v575 = vpow.pop %v574
        %v576 = vsel %vm569, %v575, 0.0
        %577 = vadd.xlane.f32.xlu0 %v576
        %v578 = vpop.xlane.xlu0 %577
        %v579 = vrcp.pop %v578
        %v580 = vmul.f32 %v575, %v579
        %v582 = vsel %vm569, %v580, 0
        %584 = vmatprep.subr.mxu0 0.0
        %585 = vmatpush1.msra.mxu0 0.0
        %586 = vmatprep.subr.mxu0 0.0
        %587 = vmatpush1.msra.mxu0 0.0
        %588 = vmatprep.subr.mxu0 0.0
        %589 = vmatpush1.msra.mxu0 0.0
        %590 = vmatprep.subr.mxu0 0.0
        %591 = vmatpush1.msra.mxu0 0.0
        %592 = vmatprep.subr.mxu0 0.0
        %593 = vmatpush1.msra.mxu0 0.0
        %594 = vmatprep.subr.mxu0 0.0
        %595 = vmatpush1.msra.mxu0 0.0
        %596 = vmatprep.subr.mxu0 0.0
        %597 = vmatpush1.msra.mxu0 0.0
        %598 = vmatprep.subr.mxu0 0.0
        %599 = vmatpush1.msra.mxu0 0.0
        %600 = vmatprep.subr.mxu0 0.0
        %601 = vmatpush1.msra.mxu0 0.0
        %602 = vmatprep.subr.mxu0 0.0
        %603 = vmatpush1.msra.mxu0 0.0
        %604 = vmatprep.subr.mxu0 0.0
        %605 = vmatpush1.msra.mxu0 0.0
        %606 = vmatprep.subr.mxu0 0.0
        %607 = vmatpush1.msra.mxu0 0.0
        %608 = vmatprep.subr.mxu0 0.0
        %609 = vmatpush1.msra.mxu0 0.0
        %610 = vmatprep.subr.mxu0 0.0
        %611 = vmatpush1.msra.mxu0 0.0
        %612 = vmatprep.subr.mxu0 0.0
        %613 = vmatpush1.msra.mxu0 0.0
        %614 = vmatprep.subr.mxu0 0.0
        %615 = vmatpush1.msra.mxu0 %v489
        %616 = vmatprep.subr.mxu0 0.0
        %617 = vmatpush2.msra.mxu0 0.0
        %618 = vmatprep.subr.mxu0 0.0
        %619 = vmatpush2.msra.mxu0 0.0
        %620 = vmatprep.subr.mxu0 0.0
        %621 = vmatpush2.msra.mxu0 0.0
        %622 = vmatprep.subr.mxu0 0.0
        %623 = vmatpush2.msra.mxu0 0.0
        %624 = vmatprep.subr.mxu0 0.0
        %625 = vmatpush2.msra.mxu0 0.0
        %626 = vmatprep.subr.mxu0 0.0
        %627 = vmatpush2.msra.mxu0 0.0
        %628 = vmatprep.subr.mxu0 0.0
        %629 = vmatpush2.msra.mxu0 0.0
        %630 = vmatprep.subr.mxu0 0.0
        %631 = vmatpush2.msra.mxu0 0.0
        %632 = vmatprep.subr.mxu0 0.0
        %633 = vmatpush2.msra.mxu0 0.0
        %634 = vmatprep.subr.mxu0 0.0
        %635 = vmatpush2.msra.mxu0 0.0
        %636 = vmatprep.subr.mxu0 0.0
        %637 = vmatpush2.msra.mxu0 0.0
        %638 = vmatprep.subr.mxu0 0.0
        %639 = vmatpush2.msra.mxu0 0.0
        %640 = vmatprep.subr.mxu0 0.0
        %641 = vmatpush2.msra.mxu0 0.0
        %642 = vmatprep.subr.mxu0 0.0
        %643 = vmatpush2.msra.mxu0 0.0
        %644 = vmatprep.subr.mxu0 0.0
        %645 = vmatpush2.msra.mxu0 0.0
        %646 = vmatprep.subr.mxu0 0.0
        %647 = vmatpush2.msra.mxu0 0.0
        %648 = vmatprep.mubr.f32.mxu0 0.0
        %649 = vmatmul.mubr.f32.gmra.mxu0 %v582
        %v650 = vpop.f32.mrf.mxu0
        %v651 = vadd.f32 0.0, %v650
        %v652 = vpop.f32.mrf.mxu0
        %653 = vdwg.mxu0
        %654 = vrot.lane.b32.xlu0 %v331, 96
        %v655 = vpop.permute.xlu0 %654
        %656 = vrot.lane.b32.xlu0 %v412, 96
        %v657 = vpop.permute.xlu0 %656
        %v658 = vsel %vm256, %v655, 0
        %v660 = vsel %vm256, %v657, 0
        %662 = vmatprep.subr.mxu0 0.0
        %663 = vmatpush1.xpose.msra.mxu0 0.0
        %664 = vmatprep.subr.mxu0 0.0
        %665 = vmatpush1.xpose.msra.mxu0 0.0
        %666 = vmatprep.subr.mxu0 0.0
        %667 = vmatpush1.xpose.msra.mxu0 0.0
        %668 = vmatprep.subr.mxu0 0.0
        %669 = vmatpush1.xpose.msra.mxu0 0.0
        %670 = vmatprep.subr.mxu0 0.0
        %671 = vmatpush1.xpose.msra.mxu0 0.0
        %672 = vmatprep.subr.mxu0 0.0
        %673 = vmatpush1.xpose.msra.mxu0 0.0
        %674 = vmatprep.subr.mxu0 0.0
        %675 = vmatpush1.xpose.msra.mxu0 0.0
        %676 = vmatprep.subr.mxu0 0.0
        %677 = vmatpush1.xpose.msra.mxu0 0.0
        %678 = vmatprep.subr.mxu0 0.0
        %679 = vmatpush1.xpose.msra.mxu0 0.0
        %680 = vmatprep.subr.mxu0 0.0
        %681 = vmatpush1.xpose.msra.mxu0 0.0
        %682 = vmatprep.subr.mxu0 0.0
        %683 = vmatpush1.xpose.msra.mxu0 0.0
        %684 = vmatprep.subr.mxu0 0.0
        %685 = vmatpush1.xpose.msra.mxu0 0.0
        %686 = vmatprep.subr.mxu0 0.0
        %687 = vmatpush1.xpose.msra.mxu0 0.0
        %688 = vmatprep.subr.mxu0 0.0
        %689 = vmatpush1.xpose.msra.mxu0 0.0
        %690 = vmatprep.subr.mxu0 0.0
        %691 = vmatpush1.xpose.msra.mxu0 0.0
        %692 = vmatprep.subr.mxu0 0.0
        %693 = vmatpush1.xpose.msra.mxu0 %v660
        %694 = vmatprep.subr.mxu0 0.0
        %695 = vmatpush2.xpose.msra.mxu0 0.0
        %696 = vmatprep.subr.mxu0 0.0
        %697 = vmatpush2.xpose.msra.mxu0 0.0
        %698 = vmatprep.subr.mxu0 0.0
        %699 = vmatpush2.xpose.msra.mxu0 0.0
        %700 = vmatprep.subr.mxu0 0.0
        %701 = vmatpush2.xpose.msra.mxu0 0.0
        %702 = vmatprep.subr.mxu0 0.0
        %703 = vmatpush2.xpose.msra.mxu0 0.0
        %704 = vmatprep.subr.mxu0 0.0
        %705 = vmatpush2.xpose.msra.mxu0 0.0
        %706 = vmatprep.subr.mxu0 0.0
        %707 = vmatpush2.xpose.msra.mxu0 0.0
        %708 = vmatprep.subr.mxu0 0.0
        %709 = vmatpush2.xpose.msra.mxu0 0.0
        %710 = vmatprep.subr.mxu0 0.0
        %711 = vmatpush2.xpose.msra.mxu0 0.0
        %712 = vmatprep.subr.mxu0 0.0
        %713 = vmatpush2.xpose.msra.mxu0 0.0
        %714 = vmatprep.subr.mxu0 0.0
        %715 = vmatpush2.xpose.msra.mxu0 0.0
        %716 = vmatprep.subr.mxu0 0.0
        %717 = vmatpush2.xpose.msra.mxu0 0.0
        %718 = vmatprep.subr.mxu0 0.0
        %719 = vmatpush2.xpose.msra.mxu0 0.0
        %720 = vmatprep.subr.mxu0 0.0
        %721 = vmatpush2.xpose.msra.mxu0 0.0
        %722 = vmatprep.subr.mxu0 0.0
        %723 = vmatpush2.xpose.msra.mxu0 0.0
        %724 = vmatprep.subr.mxu0 0.0
        %725 = vmatpush2.xpose.msra.mxu0 0.0
        %726 = vmatprep.mubr.f32.mxu0 0.0
        %727 = vmatmul.mubr.f32.gmra.mxu0 %v658
        %v728 = vpop.f32.mrf.mxu0
        %v729 = vadd.f32 0.0, %v728
        %v730 = vpop.f32.mrf.mxu0
        %731 = vdwg.mxu0
        %v732 = vsel %vm569, %v729, -inf
        %733 = vmax.xlane.f32.xlu0 %v732
        %v734 = vpop.xlane.xlu0 %733
        %v735 = vsub.f32 %v729, %v734
        %v736 = vmul.f32 %v735, 1.442695
        %v737 = vpow.pop %v736
        %v738 = vsel %vm569, %v737, 0.0
        %739 = vadd.xlane.f32.xlu0 %v738
        %v740 = vpop.xlane.xlu0 %739
        %v741 = vrcp.pop %v740
        %v742 = vmul.f32 %v737, %v741
        %744 = vrot.lane.b32.xlu0 %v489, 96
        %v745 = vpop.permute.xlu0 %744
        %v748 = vsel %vm569, %v742, 0
        %750 = vmatprep.subr.mxu0 0.0
        %751 = vmatpush1.msra.mxu0 0.0
        %752 = vmatprep.subr.mxu0 0.0
        %753 = vmatpush1.msra.mxu0 0.0
        %754 = vmatprep.subr.mxu0 0.0
        %755 = vmatpush1.msra.mxu0 0.0
        %756 = vmatprep.subr.mxu0 0.0
        %757 = vmatpush1.msra.mxu0 0.0
        %758 = vmatprep.subr.mxu0 0.0
        %759 = vmatpush1.msra.mxu0 0.0
        %760 = vmatprep.subr.mxu0 0.0
        %761 = vmatpush1.msra.mxu0 0.0
        %762 = vmatprep.subr.mxu0 0.0
        %763 = vmatpush1.msra.mxu0 0.0
        %764 = vmatprep.subr.mxu0 0.0
        %765 = vmatpush1.msra.mxu0 0.0
        %766 = vmatprep.subr.mxu0 0.0
        %767 = vmatpush1.msra.mxu0 0.0
        %768 = vmatprep.subr.mxu0 0.0
        %769 = vmatpush1.msra.mxu0 0.0
        %770 = vmatprep.subr.mxu0 0.0
        %771 = vmatpush1.msra.mxu0 0.0
        %772 = vmatprep.subr.mxu0 0.0
        %773 = vmatpush1.msra.mxu0 0.0
        %774 = vmatprep.subr.mxu0 0.0
        %775 = vmatpush1.msra.mxu0 0.0
        %776 = vmatprep.subr.mxu0 0.0
        %777 = vmatpush1.msra.mxu0 0.0
        %778 = vmatprep.subr.mxu0 0.0
        %779 = vmatpush1.msra.mxu0 0.0
        %780 = vmatprep.subr.mxu0 0.0
        %781 = vmatpush1.msra.mxu0 %v745
        %782 = vmatprep.subr.mxu0 0.0
        %783 = vmatpush2.msra.mxu0 0.0
        %784 = vmatprep.subr.mxu0 0.0
        %785 = vmatpush2.msra.mxu0 0.0
        %786 = vmatprep.subr.mxu0 0.0
        %787 = vmatpush2.msra.mxu0 0.0
        %788 = vmatprep.subr.mxu0 0.0
        %789 = vmatpush2.msra.mxu0 0.0
        %790 = vmatprep.subr.mxu0 0.0
        %791 = vmatpush2.msra.mxu0 0.0
        %792 = vmatprep.subr.mxu0 0.0
        %793 = vmatpush2.msra.mxu0 0.0
        %794 = vmatprep.subr.mxu0 0.0
        %795 = vmatpush2.msra.mxu0 0.0
        %796 = vmatprep.subr.mxu0 0.0
        %797 = vmatpush2.msra.mxu0 0.0
        %798 = vmatprep.subr.mxu0 0.0
        %799 = vmatpush2.msra.mxu0 0.0
        %800 = vmatprep.subr.mxu0 0.0
        %801 = vmatpush2.msra.mxu0 0.0
        %802 = vmatprep.subr.mxu0 0.0
        %803 = vmatpush2.msra.mxu0 0.0
        %804 = vmatprep.subr.mxu0 0.0
        %805 = vmatpush2.msra.mxu0 0.0
        %806 = vmatprep.subr.mxu0 0.0
        %807 = vmatpush2.msra.mxu0 0.0
        %808 = vmatprep.subr.mxu0 0.0
        %809 = vmatpush2.msra.mxu0 0.0
        %810 = vmatprep.subr.mxu0 0.0
        %811 = vmatpush2.msra.mxu0 0.0
        %812 = vmatprep.subr.mxu0 0.0
        %813 = vmatpush2.msra.mxu0 0.0
        %814 = vmatprep.mubr.f32.mxu0 0.0
        %815 = vmatmul.mubr.f32.gmra.mxu0 %v748
        %v816 = vpop.f32.mrf.mxu0
        %v817 = vadd.f32 0.0, %v816
        %v818 = vpop.f32.mrf.mxu0
        %819 = vdwg.mxu0
        %820 = vrot.lane.b32.xlu0 %v331, 64
        %v821 = vpop.permute.xlu0 %820
        %822 = vrot.lane.b32.xlu0 %v412, 64
        %v823 = vpop.permute.xlu0 %822
        %v824 = vsel %vm256, %v821, 0
        %v826 = vsel %vm256, %v823, 0
        %828 = vmatprep.subr.mxu0 0.0
        %829 = vmatpush1.xpose.msra.mxu0 0.0
        %830 = vmatprep.subr.mxu0 0.0
        %831 = vmatpush1.xpose.msra.mxu0 0.0
        %832 = vmatprep.subr.mxu0 0.0
        %833 = vmatpush1.xpose.msra.mxu0 0.0
        %834 = vmatprep.subr.mxu0 0.0
        %835 = vmatpush1.xpose.msra.mxu0 0.0
        %836 = vmatprep.subr.mxu0 0.0
        %837 = vmatpush1.xpose.msra.mxu0 0.0
        %838 = vmatprep.subr.mxu0 0.0
        %839 = vmatpush1.xpose.msra.mxu0 0.0
        %840 = vmatprep.subr.mxu0 0.0
        %841 = vmatpush1.xpose.msra.mxu0 0.0
        %842 = vmatprep.subr.mxu0 0.0
        %843 = vmatpush1.xpose.msra.mxu0 0.0
        %844 = vmatprep.subr.mxu0 0.0
        %845 = vmatpush1.xpose.msra.mxu0 0.0
        %846 = vmatprep.subr.mxu0 0.0
        %847 = vmatpush1.xpose.msra.mxu0 0.0
        %848 = vmatprep.subr.mxu0 0.0
        %849 = vmatpush1.xpose.msra.mxu0 0.0
        %850 = vmatprep.subr.mxu0 0.0
        %851 = vmatpush1.xpose.msra.mxu0 0.0
        %852 = vmatprep.subr.mxu0 0.0
        %853 = vmatpush1.xpose.msra.mxu0 0.0
        %854 = vmatprep.subr.mxu0 0.0
        %855 = vmatpush1.xpose.msra.mxu0 0.0
        %856 = vmatprep.subr.mxu0 0.0
        %857 = vmatpush1.xpose.msra.mxu0 0.0
        %858 = vmatprep.subr.mxu0 0.0
        %859 = vmatpush1.xpose.msra.mxu0 %v826
        %860 = vmatprep.subr.mxu0 0.0
        %861 = vmatpush2.xpose.msra.mxu0 0.0
        %862 = vmatprep.subr.mxu0 0.0
        %863 = vmatpush2.xpose.msra.mxu0 0.0
        %864 = vmatprep.subr.mxu0 0.0
        %865 = vmatpush2.xpose.msra.mxu0 0.0
        %866 = vmatprep.subr.mxu0 0.0
        %867 = vmatpush2.xpose.msra.mxu0 0.0
        %868 = vmatprep.subr.mxu0 0.0
        %869 = vmatpush2.xpose.msra.mxu0 0.0
        %870 = vmatprep.subr.mxu0 0.0
        %871 = vmatpush2.xpose.msra.mxu0 0.0
        %872 = vmatprep.subr.mxu0 0.0
        %873 = vmatpush2.xpose.msra.mxu0 0.0
        %874 = vmatprep.subr.mxu0 0.0
        %875 = vmatpush2.xpose.msra.mxu0 0.0
        %876 = vmatprep.subr.mxu0 0.0
        %877 = vmatpush2.xpose.msra.mxu0 0.0
        %878 = vmatprep.subr.mxu0 0.0
        %879 = vmatpush2.xpose.msra.mxu0 0.0
        %880 = vmatprep.subr.mxu0 0.0
        %881 = vmatpush2.xpose.msra.mxu0 0.0
        %882 = vmatprep.subr.mxu0 0.0
        %883 = vmatpush2.xpose.msra.mxu0 0.0
        %884 = vmatprep.subr.mxu0 0.0
        %885 = vmatpush2.xpose.msra.mxu0 0.0
        %886 = vmatprep.subr.mxu0 0.0
        %887 = vmatpush2.xpose.msra.mxu0 0.0
        %888 = vmatprep.subr.mxu0 0.0
        %889 = vmatpush2.xpose.msra.mxu0 0.0
        %890 = vmatprep.subr.mxu0 0.0
        %891 = vmatpush2.xpose.msra.mxu0 0.0
        %892 = vmatprep.mubr.f32.mxu0 0.0
        %893 = vmatmul.mubr.f32.gmra.mxu0 %v824
        %v894 = vpop.f32.mrf.mxu0
        %v895 = vadd.f32 0.0, %v894
        %v896 = vpop.f32.mrf.mxu0
        %897 = vdwg.mxu0
        %v898 = vsel %vm569, %v895, -inf
        %899 = vmax.xlane.f32.xlu0 %v898
        %v900 = vpop.xlane.xlu0 %899
        %v901 = vsub.f32 %v895, %v900
        %v902 = vmul.f32 %v901, 1.442695
        %v903 = vpow.pop %v902
        %v904 = vsel %vm569, %v903, 0.0
        %905 = vadd.xlane.f32.xlu0 %v904
        %v906 = vpop.xlane.xlu0 %905
        %v907 = vrcp.pop %v906
        %v908 = vmul.f32 %v903, %v907
        %909 = vrot.lane.b32.xlu0 %v489, 64
        %v910 = vpop.permute.xlu0 %909
        %v913 = vsel %vm569, %v908, 0
        %915 = vmatprep.subr.mxu0 0.0
        %916 = vmatpush1.msra.mxu0 0.0
        %917 = vmatprep.subr.mxu0 0.0
        %918 = vmatpush1.msra.mxu0 0.0
        %919 = vmatprep.subr.mxu0 0.0
        %920 = vmatpush1.msra.mxu0 0.0
        %921 = vmatprep.subr.mxu0 0.0
        %922 = vmatpush1.msra.mxu0 0.0
        %923 = vmatprep.subr.mxu0 0.0
        %924 = vmatpush1.msra.mxu0 0.0
        %925 = vmatprep.subr.mxu0 0.0
        %926 = vmatpush1.msra.mxu0 0.0
        %927 = vmatprep.subr.mxu0 0.0
        %928 = vmatpush1.msra.mxu0 0.0
        %929 = vmatprep.subr.mxu0 0.0
        %930 = vmatpush1.msra.mxu0 0.0
        %931 = vmatprep.subr.mxu0 0.0
        %932 = vmatpush1.msra.mxu0 0.0
        %933 = vmatprep.subr.mxu0 0.0
        %934 = vmatpush1.msra.mxu0 0.0
        %935 = vmatprep.subr.mxu0 0.0
        %936 = vmatpush1.msra.mxu0 0.0
        %937 = vmatprep.subr.mxu0 0.0
        %938 = vmatpush1.msra.mxu0 0.0
        %939 = vmatprep.subr.mxu0 0.0
        %940 = vmatpush1.msra.mxu0 0.0
        %941 = vmatprep.subr.mxu0 0.0
        %942 = vmatpush1.msra.mxu0 0.0
        %943 = vmatprep.subr.mxu0 0.0
        %944 = vmatpush1.msra.mxu0 0.0
        %945 = vmatprep.subr.mxu0 0.0
        %946 = vmatpush1.msra.mxu0 %v910
        %947 = vmatprep.subr.mxu0 0.0
        %948 = vmatpush2.msra.mxu0 0.0
        %949 = vmatprep.subr.mxu0 0.0
        %950 = vmatpush2.msra.mxu0 0.0
        %951 = vmatprep.subr.mxu0 0.0
        %952 = vmatpush2.msra.mxu0 0.0
        %953 = vmatprep.subr.mxu0 0.0
        %954 = vmatpush2.msra.mxu0 0.0
        %955 = vmatprep.subr.mxu0 0.0
        %956 = vmatpush2.msra.mxu0 0.0
        %957 = vmatprep.subr.mxu0 0.0
        %958 = vmatpush2.msra.mxu0 0.0
        %959 = vmatprep.subr.mxu0 0.0
        %960 = vmatpush2.msra.mxu0 0.0
        %961 = vmatprep.subr.mxu0 0.0
        %962 = vmatpush2.msra.mxu0 0.0
        %963 = vmatprep.subr.mxu0 0.0
        %964 = vmatpush2.msra.mxu0 0.0
        %965 = vmatprep.subr.mxu0 0.0
        %966 = vmatpush2.msra.mxu0 0.0
        %967 = vmatprep.subr.mxu0 0.0
        %968 = vmatpush2.msra.mxu0 0.0
        %969 = vmatprep.subr.mxu0 0.0
        %970 = vmatpush2.msra.mxu0 0.0
        %971 = vmatprep.subr.mxu0 0.0
        %972 = vmatpush2.msra.mxu0 0.0
        %973 = vmatprep.subr.mxu0 0.0
        %974 = vmatpush2.msra.mxu0 0.0
        %975 = vmatprep.subr.mxu0 0.0
        %976 = vmatpush2.msra.mxu0 0.0
        %977 = vmatprep.subr.mxu0 0.0
        %978 = vmatpush2.msra.mxu0 0.0
        %979 = vmatprep.mubr.f32.mxu0 0.0
        %980 = vmatmul.mubr.f32.gmra.mxu0 %v913
        %v981 = vpop.f32.mrf.mxu0
        %v982 = vadd.f32 0.0, %v981
        %v983 = vpop.f32.mrf.mxu0
        %984 = vdwg.mxu0
        %985 = vrot.lane.b32.xlu0 %v331, 32
        %v986 = vpop.permute.xlu0 %985
        %987 = vrot.lane.b32.xlu0 %v412, 32
        %v988 = vpop.permute.xlu0 %987
        %v989 = vsel %vm256, %v986, 0
        %v991 = vsel %vm256, %v988, 0
        %993 = vmatprep.subr.mxu0 0.0
        %994 = vmatpush1.xpose.msra.mxu0 0.0
        %995 = vmatprep.subr.mxu0 0.0
        %996 = vmatpush1.xpose.msra.mxu0 0.0
        %997 = vmatprep.subr.mxu0 0.0
        %998 = vmatpush1.xpose.msra.mxu0 0.0
        %999 = vmatprep.subr.mxu0 0.0
        %1000 = vmatpush1.xpose.msra.mxu0 0.0
        %1001 = vmatprep.subr.mxu0 0.0
        %1002 = vmatpush1.xpose.msra.mxu0 0.0
        %1003 = vmatprep.subr.mxu0 0.0
        %1004 = vmatpush1.xpose.msra.mxu0 0.0
        %1005 = vmatprep.subr.mxu0 0.0
        %1006 = vmatpush1.xpose.msra.mxu0 0.0
        %1007 = vmatprep.subr.mxu0 0.0
        %1008 = vmatpush1.xpose.msra.mxu0 0.0
        %1009 = vmatprep.subr.mxu0 0.0
        %1010 = vmatpush1.xpose.msra.mxu0 0.0
        %1011 = vmatprep.subr.mxu0 0.0
        %1012 = vmatpush1.xpose.msra.mxu0 0.0
        %1013 = vmatprep.subr.mxu0 0.0
        %1014 = vmatpush1.xpose.msra.mxu0 0.0
        %1015 = vmatprep.subr.mxu0 0.0
        %1016 = vmatpush1.xpose.msra.mxu0 0.0
        %1017 = vmatprep.subr.mxu0 0.0
        %1018 = vmatpush1.xpose.msra.mxu0 0.0
        %1019 = vmatprep.subr.mxu0 0.0
        %1020 = vmatpush1.xpose.msra.mxu0 0.0
        %1021 = vmatprep.subr.mxu0 0.0
        %1022 = vmatpush1.xpose.msra.mxu0 0.0
        %1023 = vmatprep.subr.mxu0 0.0
        %1024 = vmatpush1.xpose.msra.mxu0 %v991
        %1025 = vmatprep.subr.mxu0 0.0
        %1026 = vmatpush2.xpose.msra.mxu0 0.0
        %1027 = vmatprep.subr.mxu0 0.0
        %1028 = vmatpush2.xpose.msra.mxu0 0.0
        %1029 = vmatprep.subr.mxu0 0.0
        %1030 = vmatpush2.xpose.msra.mxu0 0.0
        %1031 = vmatprep.subr.mxu0 0.0
        %1032 = vmatpush2.xpose.msra.mxu0 0.0
        %1033 = vmatprep.subr.mxu0 0.0
        %1034 = vmatpush2.xpose.msra.mxu0 0.0
        %1035 = vmatprep.subr.mxu0 0.0
        %1036 = vmatpush2.xpose.msra.mxu0 0.0
        %1037 = vmatprep.subr.mxu0 0.0
        %1038 = vmatpush2.xpose.msra.mxu0 0.0
        %1039 = vmatprep.subr.mxu0 0.0
        %1040 = vmatpush2.xpose.msra.mxu0 0.0
        %1041 = vmatprep.subr.mxu0 0.0
        %1042 = vmatpush2.xpose.msra.mxu0 0.0
        %1043 = vmatprep.subr.mxu0 0.0
        %1044 = vmatpush2.xpose.msra.mxu0 0.0
        %1045 = vmatprep.subr.mxu0 0.0
        %1046 = vmatpush2.xpose.msra.mxu0 0.0
        %1047 = vmatprep.subr.mxu0 0.0
        %1048 = vmatpush2.xpose.msra.mxu0 0.0
        %1049 = vmatprep.subr.mxu0 0.0
        %1050 = vmatpush2.xpose.msra.mxu0 0.0
        %1051 = vmatprep.subr.mxu0 0.0
        %1052 = vmatpush2.xpose.msra.mxu0 0.0
        %1053 = vmatprep.subr.mxu0 0.0
        %1054 = vmatpush2.xpose.msra.mxu0 0.0
        %1055 = vmatprep.subr.mxu0 0.0
        %1056 = vmatpush2.xpose.msra.mxu0 0.0
        %1057 = vmatprep.mubr.f32.mxu0 0.0
        %1058 = vmatmul.mubr.f32.gmra.mxu0 %v989
        %v1059 = vpop.f32.mrf.mxu0
        %v1060 = vadd.f32 0.0, %v1059
        %v1061 = vpop.f32.mrf.mxu0
        %1062 = vdwg.mxu0
        %v1063 = vsel %vm569, %v1060, -inf
        %1064 = vmax.xlane.f32.xlu0 %v1063
        %v1065 = vpop.xlane.xlu0 %1064
        %v1066 = vsub.f32 %v1060, %v1065
        %v1067 = vmul.f32 %v1066, 1.442695
        %v1068 = vpow.pop %v1067
        %v1069 = vsel %vm569, %v1068, 0.0
        %1070 = vadd.xlane.f32.xlu0 %v1069
        %v1071 = vpop.xlane.xlu0 %1070
        %v1072 = vrcp.pop %v1071
        %v1073 = vmul.f32 %v1068, %v1072
        %1074 = vrot.lane.b32.xlu0 %v489, 32
        %v1075 = vpop.permute.xlu0 %1074
        %v1078 = vsel %vm569, %v1073, 0
        %1080 = vmatprep.subr.mxu0 0.0
        %1081 = vmatpush1.msra.mxu0 0.0
        %1082 = vmatprep.subr.mxu0 0.0
        %1083 = vmatpush1.msra.mxu0 0.0
        %1084 = vmatprep.subr.mxu0 0.0
        %1085 = vmatpush1.msra.mxu0 0.0
        %1086 = vmatprep.subr.mxu0 0.0
        %1087 = vmatpush1.msra.mxu0 0.0
        %1088 = vmatprep.subr.mxu0 0.0
        %1089 = vmatpush1.msra.mxu0 0.0
        %1090 = vmatprep.subr.mxu0 0.0
        %1091 = vmatpush1.msra.mxu0 0.0
        %1092 = vmatprep.subr.mxu0 0.0
        %1093 = vmatpush1.msra.mxu0 0.0
        %1094 = vmatprep.subr.mxu0 0.0
        %1095 = vmatpush1.msra.mxu0 0.0
        %1096 = vmatprep.subr.mxu0 0.0
        %1097 = vmatpush1.msra.mxu0 0.0
        %1098 = vmatprep.subr.mxu0 0.0
        %1099 = vmatpush1.msra.mxu0 0.0
        %1100 = vmatprep.subr.mxu0 0.0
        %1101 = vmatpush1.msra.mxu0 0.0
        %1102 = vmatprep.subr.mxu0 0.0
        %1103 = vmatpush1.msra.mxu0 0.0
        %1104 = vmatprep.subr.mxu0 0.0
        %1105 = vmatpush1.msra.mxu0 0.0
        %1106 = vmatprep.subr.mxu0 0.0
        %1107 = vmatpush1.msra.mxu0 0.0
        %1108 = vmatprep.subr.mxu0 0.0
        %1109 = vmatpush1.msra.mxu0 0.0
        %1110 = vmatprep.subr.mxu0 0.0
        %1111 = vmatpush1.msra.mxu0 %v1075
        %1112 = vmatprep.subr.mxu0 0.0
        %1113 = vmatpush2.msra.mxu0 0.0
        %1114 = vmatprep.subr.mxu0 0.0
        %1115 = vmatpush2.msra.mxu0 0.0
        %1116 = vmatprep.subr.mxu0 0.0
        %1117 = vmatpush2.msra.mxu0 0.0
        %1118 = vmatprep.subr.mxu0 0.0
        %1119 = vmatpush2.msra.mxu0 0.0
        %1120 = vmatprep.subr.mxu0 0.0
        %1121 = vmatpush2.msra.mxu0 0.0
        %1122 = vmatprep.subr.mxu0 0.0
        %1123 = vmatpush2.msra.mxu0 0.0
        %1124 = vmatprep.subr.mxu0 0.0
        %1125 = vmatpush2.msra.mxu0 0.0
        %1126 = vmatprep.subr.mxu0 0.0
        %1127 = vmatpush2.msra.mxu0 0.0
        %1128 = vmatprep.subr.mxu0 0.0
        %1129 = vmatpush2.msra.mxu0 0.0
        %1130 = vmatprep.subr.mxu0 0.0
        %1131 = vmatpush2.msra.mxu0 0.0
        %1132 = vmatprep.subr.mxu0 0.0
        %1133 = vmatpush2.msra.mxu0 0.0
        %1134 = vmatprep.subr.mxu0 0.0
        %1135 = vmatpush2.msra.mxu0 0.0
        %1136 = vmatprep.subr.mxu0 0.0
        %1137 = vmatpush2.msra.mxu0 0.0
        %1138 = vmatprep.subr.mxu0 0.0
        %1139 = vmatpush2.msra.mxu0 0.0
        %1140 = vmatprep.subr.mxu0 0.0
        %1141 = vmatpush2.msra.mxu0 0.0
        %1142 = vmatprep.subr.mxu0 0.0
        %1143 = vmatpush2.msra.mxu0 0.0
        %1144 = vmatprep.mubr.f32.mxu0 0.0
        %1145 = vmatmul.mubr.f32.gmra.mxu0 %v1078
        %v1146 = vpop.f32.mrf.mxu0
        %v1147 = vadd.f32 0.0, %v1146
        %v1148 = vpop.f32.mrf.mxu0
        %1149 = vdwg.mxu0
        %v1151 = vsel %vm256, %v332, 0
        %v1154 = vsel %vm256, %v413, 0
        %1156 = vmatprep.subr.mxu0 0.0
        %1157 = vmatpush1.xpose.msra.mxu0 0.0
        %1158 = vmatprep.subr.mxu0 0.0
        %1159 = vmatpush1.xpose.msra.mxu0 0.0
        %1160 = vmatprep.subr.mxu0 0.0
        %1161 = vmatpush1.xpose.msra.mxu0 0.0
        %1162 = vmatprep.subr.mxu0 0.0
        %1163 = vmatpush1.xpose.msra.mxu0 0.0
        %1164 = vmatprep.subr.mxu0 0.0
        %1165 = vmatpush1.xpose.msra.mxu0 0.0
        %1166 = vmatprep.subr.mxu0 0.0
        %1167 = vmatpush1.xpose.msra.mxu0 0.0
        %1168 = vmatprep.subr.mxu0 0.0
        %1169 = vmatpush1.xpose.msra.mxu0 0.0
        %1170 = vmatprep.subr.mxu0 0.0
        %1171 = vmatpush1.xpose.msra.mxu0 0.0
        %1172 = vmatprep.subr.mxu0 0.0
        %1173 = vmatpush1.xpose.msra.mxu0 0.0
        %1174 = vmatprep.subr.mxu0 0.0
        %1175 = vmatpush1.xpose.msra.mxu0 0.0
        %1176 = vmatprep.subr.mxu0 0.0
        %1177 = vmatpush1.xpose.msra.mxu0 0.0
        %1178 = vmatprep.subr.mxu0 0.0
        %1179 = vmatpush1.xpose.msra.mxu0 0.0
        %1180 = vmatprep.subr.mxu0 0.0
        %1181 = vmatpush1.xpose.msra.mxu0 0.0
        %1182 = vmatprep.subr.mxu0 0.0
        %1183 = vmatpush1.xpose.msra.mxu0 0.0
        %1184 = vmatprep.subr.mxu0 0.0
        %1185 = vmatpush1.xpose.msra.mxu0 0.0
        %1186 = vmatprep.subr.mxu0 0.0
        %1187 = vmatpush1.xpose.msra.mxu0 %v1154
        %1188 = vmatprep.subr.mxu0 0.0
        %1189 = vmatpush2.xpose.msra.mxu0 0.0
        %1190 = vmatprep.subr.mxu0 0.0
        %1191 = vmatpush2.xpose.msra.mxu0 0.0
        %1192 = vmatprep.subr.mxu0 0.0
        %1193 = vmatpush2.xpose.msra.mxu0 0.0
        %1194 = vmatprep.subr.mxu0 0.0
        %1195 = vmatpush2.xpose.msra.mxu0 0.0
        %1196 = vmatprep.subr.mxu0 0.0
        %1197 = vmatpush2.xpose.msra.mxu0 0.0
        %1198 = vmatprep.subr.mxu0 0.0
        %1199 = vmatpush2.xpose.msra.mxu0 0.0
        %1200 = vmatprep.subr.mxu0 0.0
        %1201 = vmatpush2.xpose.msra.mxu0 0.0
        %1202 = vmatprep.subr.mxu0 0.0
        %1203 = vmatpush2.xpose.msra.mxu0 0.0
        %1204 = vmatprep.subr.mxu0 0.0
        %1205 = vmatpush2.xpose.msra.mxu0 0.0
        %1206 = vmatprep.subr.mxu0 0.0
        %1207 = vmatpush2.xpose.msra.mxu0 0.0
        %1208 = vmatprep.subr.mxu0 0.0
        %1209 = vmatpush2.xpose.msra.mxu0 0.0
        %1210 = vmatprep.subr.mxu0 0.0
        %1211 = vmatpush2.xpose.msra.mxu0 0.0
        %1212 = vmatprep.subr.mxu0 0.0
        %1213 = vmatpush2.xpose.msra.mxu0 0.0
        %1214 = vmatprep.subr.mxu0 0.0
        %1215 = vmatpush2.xpose.msra.mxu0 0.0
        %1216 = vmatprep.subr.mxu0 0.0
        %1217 = vmatpush2.xpose.msra.mxu0 0.0
        %1218 = vmatprep.subr.mxu0 0.0
        %1219 = vmatpush2.xpose.msra.mxu0 0.0
        %1220 = vmatprep.mubr.f32.mxu0 0.0
        %1221 = vmatmul.mubr.f32.gmra.mxu0 %v1151
        %v1222 = vpop.f32.mrf.mxu0
        %v1223 = vadd.f32 0.0, %v1222
        %v1224 = vpop.f32.mrf.mxu0
        %1225 = vdwg.mxu0
        %v1226 = vsel %vm569, %v1223, -inf
        %1227 = vmax.xlane.f32.xlu0 %v1226
        %v1228 = vpop.xlane.xlu0 %1227
        %v1229 = vsub.f32 %v1223, %v1228
        %v1230 = vmul.f32 %v1229, 1.442695
        %v1231 = vpow.pop %v1230
        %v1232 = vsel %vm569, %v1231, 0.0
        %1233 = vadd.xlane.f32.xlu0 %v1232
        %v1234 = vpop.xlane.xlu0 %1233
        %v1235 = vrcp.pop %v1234
        %v1236 = vmul.f32 %v1231, %v1235
        %v1238 = vsel %vm569, %v1236, 0
        %1240 = vmatprep.subr.mxu0 0.0
        %1241 = vmatpush1.msra.mxu0 0.0
        %1242 = vmatprep.subr.mxu0 0.0
        %1243 = vmatpush1.msra.mxu0 0.0
        %1244 = vmatprep.subr.mxu0 0.0
        %1245 = vmatpush1.msra.mxu0 0.0
        %1246 = vmatprep.subr.mxu0 0.0
        %1247 = vmatpush1.msra.mxu0 0.0
        %1248 = vmatprep.subr.mxu0 0.0
        %1249 = vmatpush1.msra.mxu0 0.0
        %1250 = vmatprep.subr.mxu0 0.0
        %1251 = vmatpush1.msra.mxu0 0.0
        %1252 = vmatprep.subr.mxu0 0.0
        %1253 = vmatpush1.msra.mxu0 0.0
        %1254 = vmatprep.subr.mxu0 0.0
        %1255 = vmatpush1.msra.mxu0 0.0
        %1256 = vmatprep.subr.mxu0 0.0
        %1257 = vmatpush1.msra.mxu0 0.0
        %1258 = vmatprep.subr.mxu0 0.0
        %1259 = vmatpush1.msra.mxu0 0.0
        %1260 = vmatprep.subr.mxu0 0.0
        %1261 = vmatpush1.msra.mxu0 0.0
        %1262 = vmatprep.subr.mxu0 0.0
        %1263 = vmatpush1.msra.mxu0 0.0
        %1264 = vmatprep.subr.mxu0 0.0
        %1265 = vmatpush1.msra.mxu0 0.0
        %1266 = vmatprep.subr.mxu0 0.0
        %1267 = vmatpush1.msra.mxu0 0.0
        %1268 = vmatprep.subr.mxu0 0.0
        %1269 = vmatpush1.msra.mxu0 0.0
        %1270 = vmatprep.subr.mxu0 0.0
        %1271 = vmatpush1.msra.mxu0 %v491
        %1272 = vmatprep.subr.mxu0 0.0
        %1273 = vmatpush2.msra.mxu0 0.0
        %1274 = vmatprep.subr.mxu0 0.0
        %1275 = vmatpush2.msra.mxu0 0.0
        %1276 = vmatprep.subr.mxu0 0.0
        %1277 = vmatpush2.msra.mxu0 0.0
        %1278 = vmatprep.subr.mxu0 0.0
        %1279 = vmatpush2.msra.mxu0 0.0
        %1280 = vmatprep.subr.mxu0 0.0
        %1281 = vmatpush2.msra.mxu0 0.0
        %1282 = vmatprep.subr.mxu0 0.0
        %1283 = vmatpush2.msra.mxu0 0.0
        %1284 = vmatprep.subr.mxu0 0.0
        %1285 = vmatpush2.msra.mxu0 0.0
        %1286 = vmatprep.subr.mxu0 0.0
        %1287 = vmatpush2.msra.mxu0 0.0
        %1288 = vmatprep.subr.mxu0 0.0
        %1289 = vmatpush2.msra.mxu0 0.0
        %1290 = vmatprep.subr.mxu0 0.0
        %1291 = vmatpush2.msra.mxu0 0.0
        %1292 = vmatprep.subr.mxu0 0.0
        %1293 = vmatpush2.msra.mxu0 0.0
        %1294 = vmatprep.subr.mxu0 0.0
        %1295 = vmatpush2.msra.mxu0 0.0
        %1296 = vmatprep.subr.mxu0 0.0
        %1297 = vmatpush2.msra.mxu0 0.0
        %1298 = vmatprep.subr.mxu0 0.0
        %1299 = vmatpush2.msra.mxu0 0.0
        %1300 = vmatprep.subr.mxu0 0.0
        %1301 = vmatpush2.msra.mxu0 0.0
        %1302 = vmatprep.subr.mxu0 0.0
        %1303 = vmatpush2.msra.mxu0 0.0
        %1304 = vmatprep.mubr.f32.mxu0 0.0
        %1305 = vmatmul.mubr.f32.gmra.mxu0 %v1238
        %v1306 = vpop.f32.mrf.mxu0
        %v1307 = vadd.f32 0.0, %v1306
        %v1308 = vpop.f32.mrf.mxu0
        %1309 = vdwg.mxu0
        %1310 = vrot.lane.b32.xlu0 %v332, 96
        %v1311 = vpop.permute.xlu0 %1310
        %1312 = vrot.lane.b32.xlu0 %v413, 96
        %v1313 = vpop.permute.xlu0 %1312
        %v1314 = vsel %vm256, %v1311, 0
        %v1316 = vsel %vm256, %v1313, 0
        %1318 = vmatprep.subr.mxu0 0.0
        %1319 = vmatpush1.xpose.msra.mxu0 0.0
        %1320 = vmatprep.subr.mxu0 0.0
        %1321 = vmatpush1.xpose.msra.mxu0 0.0
        %1322 = vmatprep.subr.mxu0 0.0
        %1323 = vmatpush1.xpose.msra.mxu0 0.0
        %1324 = vmatprep.subr.mxu0 0.0
        %1325 = vmatpush1.xpose.msra.mxu0 0.0
        %1326 = vmatprep.subr.mxu0 0.0
        %1327 = vmatpush1.xpose.msra.mxu0 0.0
        %1328 = vmatprep.subr.mxu0 0.0
        %1329 = vmatpush1.xpose.msra.mxu0 0.0
        %1330 = vmatprep.subr.mxu0 0.0
        %1331 = vmatpush1.xpose.msra.mxu0 0.0
        %1332 = vmatprep.subr.mxu0 0.0
        %1333 = vmatpush1.xpose.msra.mxu0 0.0
        %1334 = vmatprep.subr.mxu0 0.0
        %1335 = vmatpush1.xpose.msra.mxu0 0.0
        %1336 = vmatprep.subr.mxu0 0.0
        %1337 = vmatpush1.xpose.msra.mxu0 0.0
        %1338 = vmatprep.subr.mxu0 0.0
        %1339 = vmatpush1.xpose.msra.mxu0 0.0
        %1340 = vmatprep.subr.mxu0 0.0
        %1341 = vmatpush1.xpose.msra.mxu0 0.0
        %1342 = vmatprep.subr.mxu0 0.0
        %1343 = vmatpush1.xpose.msra.mxu0 0.0
        %1344 = vmatprep.subr.mxu0 0.0
        %1345 = vmatpush1.xpose.msra.mxu0 0.0
        %1346 = vmatprep.subr.mxu0 0.0
        %1347 = vmatpush1.xpose.msra.mxu0 0.0
        %1348 = vmatprep.subr.mxu0 0.0
        %1349 = vmatpush1.xpose.msra.mxu0 %v1316
        %1350 = vmatprep.subr.mxu0 0.0
        %1351 = vmatpush2.xpose.msra.mxu0 0.0
        %1352 = vmatprep.subr.mxu0 0.0
        %1353 = vmatpush2.xpose.msra.mxu0 0.0
        %1354 = vmatprep.subr.mxu0 0.0
        %1355 = vmatpush2.xpose.msra.mxu0 0.0
        %1356 = vmatprep.subr.mxu0 0.0
        %1357 = vmatpush2.xpose.msra.mxu0 0.0
        %1358 = vmatprep.subr.mxu0 0.0
        %1359 = vmatpush2.xpose.msra.mxu0 0.0
        %1360 = vmatprep.subr.mxu0 0.0
        %1361 = vmatpush2.xpose.msra.mxu0 0.0
        %1362 = vmatprep.subr.mxu0 0.0
        %1363 = vmatpush2.xpose.msra.mxu0 0.0
        %1364 = vmatprep.subr.mxu0 0.0
        %1365 = vmatpush2.xpose.msra.mxu0 0.0
        %1366 = vmatprep.subr.mxu0 0.0
        %1367 = vmatpush2.xpose.msra.mxu0 0.0
        %1368 = vmatprep.subr.mxu0 0.0
        %1369 = vmatpush2.xpose.msra.mxu0 0.0
        %1370 = vmatprep.subr.mxu0 0.0
        %1371 = vmatpush2.xpose.msra.mxu0 0.0
        %1372 = vmatprep.subr.mxu0 0.0
        %1373 = vmatpush2.xpose.msra.mxu0 0.0
        %1374 = vmatprep.subr.mxu0 0.0
        %1375 = vmatpush2.xpose.msra.mxu0 0.0
        %1376 = vmatprep.subr.mxu0 0.0
        %1377 = vmatpush2.xpose.msra.mxu0 0.0
        %1378 = vmatprep.subr.mxu0 0.0
        %1379 = vmatpush2.xpose.msra.mxu0 0.0
        %1380 = vmatprep.subr.mxu0 0.0
        %1381 = vmatpush2.xpose.msra.mxu0 0.0
        %1382 = vmatprep.mubr.f32.mxu0 0.0
        %1383 = vmatmul.mubr.f32.gmra.mxu0 %v1314
        %v1384 = vpop.f32.mrf.mxu0
        %v1385 = vadd.f32 0.0, %v1384
        %v1386 = vpop.f32.mrf.mxu0
        %1387 = vdwg.mxu0
        %v1388 = vsel %vm569, %v1385, -inf
        %1389 = vmax.xlane.f32.xlu0 %v1388
        %v1390 = vpop.xlane.xlu0 %1389
        %v1391 = vsub.f32 %v1385, %v1390
        %v1392 = vmul.f32 %v1391, 1.442695
        %v1393 = vpow.pop %v1392
        %v1394 = vsel %vm569, %v1393, 0.0
        %1395 = vadd.xlane.f32.xlu0 %v1394
        %v1396 = vpop.xlane.xlu0 %1395
        %v1397 = vrcp.pop %v1396
        %v1398 = vmul.f32 %v1393, %v1397
        %1400 = vrot.lane.b32.xlu0 %v491, 96
        %v1401 = vpop.permute.xlu0 %1400
        %v1404 = vsel %vm569, %v1398, 0
        %1406 = vmatprep.subr.mxu0 0.0
        %1407 = vmatpush1.msra.mxu0 0.0
        %1408 = vmatprep.subr.mxu0 0.0
        %1409 = vmatpush1.msra.mxu0 0.0
        %1410 = vmatprep.subr.mxu0 0.0
        %1411 = vmatpush1.msra.mxu0 0.0
        %1412 = vmatprep.subr.mxu0 0.0
        %1413 = vmatpush1.msra.mxu0 0.0
        %1414 = vmatprep.subr.mxu0 0.0
        %1415 = vmatpush1.msra.mxu0 0.0
        %1416 = vmatprep.subr.mxu0 0.0
        %1417 = vmatpush1.msra.mxu0 0.0
        %1418 = vmatprep.subr.mxu0 0.0
        %1419 = vmatpush1.msra.mxu0 0.0
        %1420 = vmatprep.subr.mxu0 0.0
        %1421 = vmatpush1.msra.mxu0 0.0
        %1422 = vmatprep.subr.mxu0 0.0
        %1423 = vmatpush1.msra.mxu0 0.0
        %1424 = vmatprep.subr.mxu0 0.0
        %1425 = vmatpush1.msra.mxu0 0.0
        %1426 = vmatprep.subr.mxu0 0.0
        %1427 = vmatpush1.msra.mxu0 0.0
        %1428 = vmatprep.subr.mxu0 0.0
        %1429 = vmatpush1.msra.mxu0 0.0
        %1430 = vmatprep.subr.mxu0 0.0
        %1431 = vmatpush1.msra.mxu0 0.0
        %1432 = vmatprep.subr.mxu0 0.0
        %1433 = vmatpush1.msra.mxu0 0.0
        %1434 = vmatprep.subr.mxu0 0.0
        %1435 = vmatpush1.msra.mxu0 0.0
        %1436 = vmatprep.subr.mxu0 0.0
        %1437 = vmatpush1.msra.mxu0 %v1401
        %1438 = vmatprep.subr.mxu0 0.0
        %1439 = vmatpush2.msra.mxu0 0.0
        %1440 = vmatprep.subr.mxu0 0.0
        %1441 = vmatpush2.msra.mxu0 0.0
        %1442 = vmatprep.subr.mxu0 0.0
        %1443 = vmatpush2.msra.mxu0 0.0
        %1444 = vmatprep.subr.mxu0 0.0
        %1445 = vmatpush2.msra.mxu0 0.0
        %1446 = vmatprep.subr.mxu0 0.0
        %1447 = vmatpush2.msra.mxu0 0.0
        %1448 = vmatprep.subr.mxu0 0.0
        %1449 = vmatpush2.msra.mxu0 0.0
        %1450 = vmatprep.subr.mxu0 0.0
        %1451 = vmatpush2.msra.mxu0 0.0
        %1452 = vmatprep.subr.mxu0 0.0
        %1453 = vmatpush2.msra.mxu0 0.0
        %1454 = vmatprep.subr.mxu0 0.0
        %1455 = vmatpush2.msra.mxu0 0.0
        %1456 = vmatprep.subr.mxu0 0.0
        %1457 = vmatpush2.msra.mxu0 0.0
        %1458 = vmatprep.subr.mxu0 0.0
        %1459 = vmatpush2.msra.mxu0 0.0
        %1460 = vmatprep.subr.mxu0 0.0
        %1461 = vmatpush2.msra.mxu0 0.0
        %1462 = vmatprep.subr.mxu0 0.0
        %1463 = vmatpush2.msra.mxu0 0.0
        %1464 = vmatprep.subr.mxu0 0.0
        %1465 = vmatpush2.msra.mxu0 0.0
        %1466 = vmatprep.subr.mxu0 0.0
        %1467 = vmatpush2.msra.mxu0 0.0
        %1468 = vmatprep.subr.mxu0 0.0
        %1469 = vmatpush2.msra.mxu0 0.0
        %1470 = vmatprep.mubr.f32.mxu0 0.0
        %1471 = vmatmul.mubr.f32.gmra.mxu0 %v1404
        %v1472 = vpop.f32.mrf.mxu0
        %v1473 = vadd.f32 0.0, %v1472
        %v1474 = vpop.f32.mrf.mxu0
        %1475 = vdwg.mxu0
        %1476 = vrot.lane.b32.xlu0 %v332, 64
        %v1477 = vpop.permute.xlu0 %1476
        %1478 = vrot.lane.b32.xlu0 %v413, 64
        %v1479 = vpop.permute.xlu0 %1478
        %v1480 = vsel %vm256, %v1477, 0
        %v1482 = vsel %vm256, %v1479, 0
        %1484 = vmatprep.subr.mxu0 0.0
        %1485 = vmatpush1.xpose.msra.mxu0 0.0
        %1486 = vmatprep.subr.mxu0 0.0
        %1487 = vmatpush1.xpose.msra.mxu0 0.0
        %1488 = vmatprep.subr.mxu0 0.0
        %1489 = vmatpush1.xpose.msra.mxu0 0.0
        %1490 = vmatprep.subr.mxu0 0.0
        %1491 = vmatpush1.xpose.msra.mxu0 0.0
        %1492 = vmatprep.subr.mxu0 0.0
        %1493 = vmatpush1.xpose.msra.mxu0 0.0
        %1494 = vmatprep.subr.mxu0 0.0
        %1495 = vmatpush1.xpose.msra.mxu0 0.0
        %1496 = vmatprep.subr.mxu0 0.0
        %1497 = vmatpush1.xpose.msra.mxu0 0.0
        %1498 = vmatprep.subr.mxu0 0.0
        %1499 = vmatpush1.xpose.msra.mxu0 0.0
        %1500 = vmatprep.subr.mxu0 0.0
        %1501 = vmatpush1.xpose.msra.mxu0 0.0
        %1502 = vmatprep.subr.mxu0 0.0
        %1503 = vmatpush1.xpose.msra.mxu0 0.0
        %1504 = vmatprep.subr.mxu0 0.0
        %1505 = vmatpush1.xpose.msra.mxu0 0.0
        %1506 = vmatprep.subr.mxu0 0.0
        %1507 = vmatpush1.xpose.msra.mxu0 0.0
        %1508 = vmatprep.subr.mxu0 0.0
        %1509 = vmatpush1.xpose.msra.mxu0 0.0
        %1510 = vmatprep.subr.mxu0 0.0
        %1511 = vmatpush1.xpose.msra.mxu0 0.0
        %1512 = vmatprep.subr.mxu0 0.0
        %1513 = vmatpush1.xpose.msra.mxu0 0.0
        %1514 = vmatprep.subr.mxu0 0.0
        %1515 = vmatpush1.xpose.msra.mxu0 %v1482
        %1516 = vmatprep.subr.mxu0 0.0
        %1517 = vmatpush2.xpose.msra.mxu0 0.0
        %1518 = vmatprep.subr.mxu0 0.0
        %1519 = vmatpush2.xpose.msra.mxu0 0.0
        %1520 = vmatprep.subr.mxu0 0.0
        %1521 = vmatpush2.xpose.msra.mxu0 0.0
        %1522 = vmatprep.subr.mxu0 0.0
        %1523 = vmatpush2.xpose.msra.mxu0 0.0
        %1524 = vmatprep.subr.mxu0 0.0
        %1525 = vmatpush2.xpose.msra.mxu0 0.0
        %1526 = vmatprep.subr.mxu0 0.0
        %1527 = vmatpush2.xpose.msra.mxu0 0.0
        %1528 = vmatprep.subr.mxu0 0.0
        %1529 = vmatpush2.xpose.msra.mxu0 0.0
        %1530 = vmatprep.subr.mxu0 0.0
        %1531 = vmatpush2.xpose.msra.mxu0 0.0
        %1532 = vmatprep.subr.mxu0 0.0
        %1533 = vmatpush2.xpose.msra.mxu0 0.0
        %1534 = vmatprep.subr.mxu0 0.0
        %1535 = vmatpush2.xpose.msra.mxu0 0.0
        %1536 = vmatprep.subr.mxu0 0.0
        %1537 = vmatpush2.xpose.msra.mxu0 0.0
        %1538 = vmatprep.subr.mxu0 0.0
        %1539 = vmatpush2.xpose.msra.mxu0 0.0
        %1540 = vmatprep.subr.mxu0 0.0
        %1541 = vmatpush2.xpose.msra.mxu0 0.0
        %1542 = vmatprep.subr.mxu0 0.0
        %1543 = vmatpush2.xpose.msra.mxu0 0.0
        %1544 = vmatprep.subr.mxu0 0.0
        %1545 = vmatpush2.xpose.msra.mxu0 0.0
        %1546 = vmatprep.subr.mxu0 0.0
        %1547 = vmatpush2.xpose.msra.mxu0 0.0
        %1548 = vmatprep.mubr.f32.mxu0 0.0
        %1549 = vmatmul.mubr.f32.gmra.mxu0 %v1480
        %v1550 = vpop.f32.mrf.mxu0
        %v1551 = vadd.f32 0.0, %v1550
        %v1552 = vpop.f32.mrf.mxu0
        %1553 = vdwg.mxu0
        %v1554 = vsel %vm569, %v1551, -inf
        %1555 = vmax.xlane.f32.xlu0 %v1554
        %v1556 = vpop.xlane.xlu0 %1555
        %v1557 = vsub.f32 %v1551, %v1556
        %v1558 = vmul.f32 %v1557, 1.442695
        %v1559 = vpow.pop %v1558
        %v1560 = vsel %vm569, %v1559, 0.0
        %1561 = vadd.xlane.f32.xlu0 %v1560
        %v1562 = vpop.xlane.xlu0 %1561
        %v1563 = vrcp.pop %v1562
        %v1564 = vmul.f32 %v1559, %v1563
        %1565 = vrot.lane.b32.xlu0 %v491, 64
        %v1566 = vpop.permute.xlu0 %1565
        %v1569 = vsel %vm569, %v1564, 0
        %1571 = vmatprep.subr.mxu0 0.0
        %1572 = vmatpush1.msra.mxu0 0.0
        %1573 = vmatprep.subr.mxu0 0.0
        %1574 = vmatpush1.msra.mxu0 0.0
        %1575 = vmatprep.subr.mxu0 0.0
        %1576 = vmatpush1.msra.mxu0 0.0
        %1577 = vmatprep.subr.mxu0 0.0
        %1578 = vmatpush1.msra.mxu0 0.0
        %1579 = vmatprep.subr.mxu0 0.0
        %1580 = vmatpush1.msra.mxu0 0.0
        %1581 = vmatprep.subr.mxu0 0.0
        %1582 = vmatpush1.msra.mxu0 0.0
        %1583 = vmatprep.subr.mxu0 0.0
        %1584 = vmatpush1.msra.mxu0 0.0
        %1585 = vmatprep.subr.mxu0 0.0
        %1586 = vmatpush1.msra.mxu0 0.0
        %1587 = vmatprep.subr.mxu0 0.0
        %1588 = vmatpush1.msra.mxu0 0.0
        %1589 = vmatprep.subr.mxu0 0.0
        %1590 = vmatpush1.msra.mxu0 0.0
        %1591 = vmatprep.subr.mxu0 0.0
        %1592 = vmatpush1.msra.mxu0 0.0
        %1593 = vmatprep.subr.mxu0 0.0
        %1594 = vmatpush1.msra.mxu0 0.0
        %1595 = vmatprep.subr.mxu0 0.0
        %1596 = vmatpush1.msra.mxu0 0.0
        %1597 = vmatprep.subr.mxu0 0.0
        %1598 = vmatpush1.msra.mxu0 0.0
        %1599 = vmatprep.subr.mxu0 0.0
        %1600 = vmatpush1.msra.mxu0 0.0
        %1601 = vmatprep.subr.mxu0 0.0
        %1602 = vmatpush1.msra.mxu0 %v1566
        %1603 = vmatprep.subr.mxu0 0.0
        %1604 = vmatpush2.msra.mxu0 0.0
        %1605 = vmatprep.subr.mxu0 0.0
        %1606 = vmatpush2.msra.mxu0 0.0
        %1607 = vmatprep.subr.mxu0 0.0
        %1608 = vmatpush2.msra.mxu0 0.0
        %1609 = vmatprep.subr.mxu0 0.0
        %1610 = vmatpush2.msra.mxu0 0.0
        %1611 = vmatprep.subr.mxu0 0.0
        %1612 = vmatpush2.msra.mxu0 0.0
        %1613 = vmatprep.subr.mxu0 0.0
        %1614 = vmatpush2.msra.mxu0 0.0
        %1615 = vmatprep.subr.mxu0 0.0
        %1616 = vmatpush2.msra.mxu0 0.0
        %1617 = vmatprep.subr.mxu0 0.0
        %1618 = vmatpush2.msra.mxu0 0.0
        %1619 = vmatprep.subr.mxu0 0.0
        %1620 = vmatpush2.msra.mxu0 0.0
        %1621 = vmatprep.subr.mxu0 0.0
        %1622 = vmatpush2.msra.mxu0 0.0
        %1623 = vmatprep.subr.mxu0 0.0
        %1624 = vmatpush2.msra.mxu0 0.0
        %1625 = vmatprep.subr.mxu0 0.0
        %1626 = vmatpush2.msra.mxu0 0.0
        %1627 = vmatprep.subr.mxu0 0.0
        %1628 = vmatpush2.msra.mxu0 0.0
        %1629 = vmatprep.subr.mxu0 0.0
        %1630 = vmatpush2.msra.mxu0 0.0
        %1631 = vmatprep.subr.mxu0 0.0
        %1632 = vmatpush2.msra.mxu0 0.0
        %1633 = vmatprep.subr.mxu0 0.0
        %1634 = vmatpush2.msra.mxu0 0.0
        %1635 = vmatprep.mubr.f32.mxu0 0.0
        %1636 = vmatmul.mubr.f32.gmra.mxu0 %v1569
        %v1637 = vpop.f32.mrf.mxu0
        %v1638 = vadd.f32 0.0, %v1637
        %v1639 = vpop.f32.mrf.mxu0
        %1640 = vdwg.mxu0
        %1641 = vrot.lane.b32.xlu0 %v332, 32
        %v1642 = vpop.permute.xlu0 %1641
        %1643 = vrot.lane.b32.xlu0 %v413, 32
        %v1644 = vpop.permute.xlu0 %1643
        %v1645 = vsel %vm256, %v1642, 0
        %v1647 = vsel %vm256, %v1644, 0
        %1649 = vmatprep.subr.mxu0 0.0
        %1650 = vmatpush1.xpose.msra.mxu0 0.0
        %1651 = vmatprep.subr.mxu0 0.0
        %1652 = vmatpush1.xpose.msra.mxu0 0.0
        %1653 = vmatprep.subr.mxu0 0.0
        %1654 = vmatpush1.xpose.msra.mxu0 0.0
        %1655 = vmatprep.subr.mxu0 0.0
        %1656 = vmatpush1.xpose.msra.mxu0 0.0
        %1657 = vmatprep.subr.mxu0 0.0
        %1658 = vmatpush1.xpose.msra.mxu0 0.0
        %1659 = vmatprep.subr.mxu0 0.0
        %1660 = vmatpush1.xpose.msra.mxu0 0.0
        %1661 = vmatprep.subr.mxu0 0.0
        %1662 = vmatpush1.xpose.msra.mxu0 0.0
        %1663 = vmatprep.subr.mxu0 0.0
        %1664 = vmatpush1.xpose.msra.mxu0 0.0
        %1665 = vmatprep.subr.mxu0 0.0
        %1666 = vmatpush1.xpose.msra.mxu0 0.0
        %1667 = vmatprep.subr.mxu0 0.0
        %1668 = vmatpush1.xpose.msra.mxu0 0.0
        %1669 = vmatprep.subr.mxu0 0.0
        %1670 = vmatpush1.xpose.msra.mxu0 0.0
        %1671 = vmatprep.subr.mxu0 0.0
        %1672 = vmatpush1.xpose.msra.mxu0 0.0
        %1673 = vmatprep.subr.mxu0 0.0
        %1674 = vmatpush1.xpose.msra.mxu0 0.0
        %1675 = vmatprep.subr.mxu0 0.0
        %1676 = vmatpush1.xpose.msra.mxu0 0.0
        %1677 = vmatprep.subr.mxu0 0.0
        %1678 = vmatpush1.xpose.msra.mxu0 0.0
        %1679 = vmatprep.subr.mxu0 0.0
        %1680 = vmatpush1.xpose.msra.mxu0 %v1647
        %1681 = vmatprep.subr.mxu0 0.0
        %1682 = vmatpush2.xpose.msra.mxu0 0.0
        %1683 = vmatprep.subr.mxu0 0.0
        %1684 = vmatpush2.xpose.msra.mxu0 0.0
        %1685 = vmatprep.subr.mxu0 0.0
        %1686 = vmatpush2.xpose.msra.mxu0 0.0
        %1687 = vmatprep.subr.mxu0 0.0
        %1688 = vmatpush2.xpose.msra.mxu0 0.0
        %1689 = vmatprep.subr.mxu0 0.0
        %1690 = vmatpush2.xpose.msra.mxu0 0.0
        %1691 = vmatprep.subr.mxu0 0.0
        %1692 = vmatpush2.xpose.msra.mxu0 0.0
        %1693 = vmatprep.subr.mxu0 0.0
        %1694 = vmatpush2.xpose.msra.mxu0 0.0
        %1695 = vmatprep.subr.mxu0 0.0
        %1696 = vmatpush2.xpose.msra.mxu0 0.0
        %1697 = vmatprep.subr.mxu0 0.0
        %1698 = vmatpush2.xpose.msra.mxu0 0.0
        %1699 = vmatprep.subr.mxu0 0.0
        %1700 = vmatpush2.xpose.msra.mxu0 0.0
        %1701 = vmatprep.subr.mxu0 0.0
        %1702 = vmatpush2.xpose.msra.mxu0 0.0
        %1703 = vmatprep.subr.mxu0 0.0
        %1704 = vmatpush2.xpose.msra.mxu0 0.0
        %1705 = vmatprep.subr.mxu0 0.0
        %1706 = vmatpush2.xpose.msra.mxu0 0.0
        %1707 = vmatprep.subr.mxu0 0.0
        %1708 = vmatpush2.xpose.msra.mxu0 0.0
        %1709 = vmatprep.subr.mxu0 0.0
        %1710 = vmatpush2.xpose.msra.mxu0 0.0
        %1711 = vmatprep.subr.mxu0 0.0
        %1712 = vmatpush2.xpose.msra.mxu0 0.0
        %1713 = vmatprep.mubr.f32.mxu0 0.0
        %1714 = vmatmul.mubr.f32.gmra.mxu0 %v1645
        %v1715 = vpop.f32.mrf.mxu0
        %v1716 = vadd.f32 0.0, %v1715
        %v1717 = vpop.f32.mrf.mxu0
        %1718 = vdwg.mxu0
        %v1719 = vsel %vm569, %v1716, -inf
        %1720 = vmax.xlane.f32.xlu0 %v1719
        %v1721 = vpop.xlane.xlu0 %1720
        %v1722 = vsub.f32 %v1716, %v1721
        %v1723 = vmul.f32 %v1722, 1.442695
        %v1724 = vpow.pop %v1723
        %v1725 = vsel %vm569, %v1724, 0.0
        %1726 = vadd.xlane.f32.xlu0 %v1725
        %v1727 = vpop.xlane.xlu0 %1726
        %v1728 = vrcp.pop %v1727
        %v1729 = vmul.f32 %v1724, %v1728
        %1730 = vrot.lane.b32.xlu0 %v491, 32
        %v1731 = vpop.permute.xlu0 %1730
        %v1734 = vsel %vm569, %v1729, 0
        %1736 = vmatprep.subr.mxu0 0.0
        %1737 = vmatpush1.msra.mxu0 0.0
        %1738 = vmatprep.subr.mxu0 0.0
        %1739 = vmatpush1.msra.mxu0 0.0
        %1740 = vmatprep.subr.mxu0 0.0
        %1741 = vmatpush1.msra.mxu0 0.0
        %1742 = vmatprep.subr.mxu0 0.0
        %1743 = vmatpush1.msra.mxu0 0.0
        %1744 = vmatprep.subr.mxu0 0.0
        %1745 = vmatpush1.msra.mxu0 0.0
        %1746 = vmatprep.subr.mxu0 0.0
        %1747 = vmatpush1.msra.mxu0 0.0
        %1748 = vmatprep.subr.mxu0 0.0
        %1749 = vmatpush1.msra.mxu0 0.0
        %1750 = vmatprep.subr.mxu0 0.0
        %1751 = vmatpush1.msra.mxu0 0.0
        %1752 = vmatprep.subr.mxu0 0.0
        %1753 = vmatpush1.msra.mxu0 0.0
        %1754 = vmatprep.subr.mxu0 0.0
        %1755 = vmatpush1.msra.mxu0 0.0
        %1756 = vmatprep.subr.mxu0 0.0
        %1757 = vmatpush1.msra.mxu0 0.0
        %1758 = vmatprep.subr.mxu0 0.0
        %1759 = vmatpush1.msra.mxu0 0.0
        %1760 = vmatprep.subr.mxu0 0.0
        %1761 = vmatpush1.msra.mxu0 0.0
        %1762 = vmatprep.subr.mxu0 0.0
        %1763 = vmatpush1.msra.mxu0 0.0
        %1764 = vmatprep.subr.mxu0 0.0
        %1765 = vmatpush1.msra.mxu0 0.0
        %1766 = vmatprep.subr.mxu0 0.0
        %1767 = vmatpush1.msra.mxu0 %v1731
        %1768 = vmatprep.subr.mxu0 0.0
        %1769 = vmatpush2.msra.mxu0 0.0
        %1770 = vmatprep.subr.mxu0 0.0
        %1771 = vmatpush2.msra.mxu0 0.0
        %1772 = vmatprep.subr.mxu0 0.0
        %1773 = vmatpush2.msra.mxu0 0.0
        %1774 = vmatprep.subr.mxu0 0.0
        %1775 = vmatpush2.msra.mxu0 0.0
        %1776 = vmatprep.subr.mxu0 0.0
        %1777 = vmatpush2.msra.mxu0 0.0
        %1778 = vmatprep.subr.mxu0 0.0
        %1779 = vmatpush2.msra.mxu0 0.0
        %1780 = vmatprep.subr.mxu0 0.0
        %1781 = vmatpush2.msra.mxu0 0.0
        %1782 = vmatprep.subr.mxu0 0.0
        %1783 = vmatpush2.msra.mxu0 0.0
        %1784 = vmatprep.subr.mxu0 0.0
        %1785 = vmatpush2.msra.mxu0 0.0
        %1786 = vmatprep.subr.mxu0 0.0
        %1787 = vmatpush2.msra.mxu0 0.0
        %1788 = vmatprep.subr.mxu0 0.0
        %1789 = vmatpush2.msra.mxu0 0.0
        %1790 = vmatprep.subr.mxu0 0.0
        %1791 = vmatpush2.msra.mxu0 0.0
        %1792 = vmatprep.subr.mxu0 0.0
        %1793 = vmatpush2.msra.mxu0 0.0
        %1794 = vmatprep.subr.mxu0 0.0
        %1795 = vmatpush2.msra.mxu0 0.0
        %1796 = vmatprep.subr.mxu0 0.0
        %1797 = vmatpush2.msra.mxu0 0.0
        %1798 = vmatprep.subr.mxu0 0.0
        %1799 = vmatpush2.msra.mxu0 0.0
        %1800 = vmatprep.mubr.f32.mxu0 0.0
        %1801 = vmatmul.mubr.f32.gmra.mxu0 %v1734
        %v1802 = vpop.f32.mrf.mxu0
        %v1803 = vadd.f32 0.0, %v1802
        %v1804 = vpop.f32.mrf.mxu0
        %1805 = vdwg.mxu0
        %1807 = vrot.lane.b32.xlu0 %v817, 32
        %v1808 = vpop.permute.xlu0 %1807
        %1811 = vrot.lane.b32.xlu0 %v982, 64
        %v1812 = vpop.permute.xlu0 %1811
        %1815 = vrot.lane.b32.xlu0 %v1147, 96
        %v1816 = vpop.permute.xlu0 %1815
        %1819 = vrot.lane.b32.xlu0 %v1473, 32
        %v1820 = vpop.permute.xlu0 %1819
        %1823 = vrot.lane.b32.xlu0 %v1638, 64
        %v1824 = vpop.permute.xlu0 %1823
        %1827 = vrot.lane.b32.xlu0 %v1803, 96
        %v1828 = vpop.permute.xlu0 %1827
        %v1830 = vsel %vm256, %v651, %v1808
        %vm1831 = vcmask 523264
        %v1832 = vsel %vm1831, %v1830, %v1812
        %vm1833 = vcmask 785408
        %v1834 = vsel %vm1833, %v1832, %v1816
        %v1835 = vsel %vm256, %v1307, %v1820
        %v1836 = vsel %vm1831, %v1835, %v1824
        %v1837 = vsel %vm1833, %v1836, %v1828
        %v1838 = vld [vmem:[%s4] sm:$0xff]
        %v1839 = vld [vmem:[%s4 + $0x8] sm:$0xff]
        %v1840 = vld [vmem:[%s4 + $0x10] sm:$0xff]
        %v1841 = vld [vmem:[%s4 + $0x18] sm:$0xff]
        %v1842 = vld [vmem:[%s4 + $0x20] sm:$0xff]
        %v1843 = vld [vmem:[%s4 + $0x28] sm:$0xff]
        %v1844 = vld [vmem:[%s4 + $0x30] sm:$0xff]
        %v1845 = vld [vmem:[%s4 + $0x38] sm:$0xff]
        %v1846 = vld [vmem:[%s4 + $0x40] sm:$0xff]
        %v1847 = vld [vmem:[%s4 + $0x48] sm:$0xff]
        %v1848 = vld [vmem:[%s4 + $0x50] sm:$0xff]
        %v1849 = vld [vmem:[%s4 + $0x58] sm:$0xff]
        %v1850 = vld [vmem:[%s4 + $0x60] sm:$0xff]
        %v1851 = vld [vmem:[%s4 + $0x68] sm:$0xff]
        %v1852 = vld [vmem:[%s4 + $0x70] sm:$0xff]
        %v1853 = vld [vmem:[%s4 + $0x78] sm:$0xff]
        %v1854 = vld [vmem:[%s4 + $0x80] sm:$0xff]
        %v1855 = vld [vmem:[%s4 + $0x88] sm:$0xff]
        %v1856 = vld [vmem:[%s4 + $0x90] sm:$0xff]
        %v1857 = vld [vmem:[%s4 + $0x98] sm:$0xff]
        %v1858 = vld [vmem:[%s4 + $0xa0] sm:$0xff]
        %v1859 = vld [vmem:[%s4 + $0xa8] sm:$0xff]
        %v1860 = vld [vmem:[%s4 + $0xb0] sm:$0xff]
        %v1861 = vld [vmem:[%s4 + $0xb8] sm:$0xff]
        %v1862 = vld [vmem:[%s4 + $0xc0] sm:$0xff]
        %v1863 = vld [vmem:[%s4 + $0xc8] sm:$0xff]
        %v1864 = vld [vmem:[%s4 + $0xd0] sm:$0xff]
        %v1865 = vld [vmem:[%s4 + $0xd8] sm:$0xff]
        %v1866 = vld [vmem:[%s4 + $0xe0] sm:$0xff]
        %v1867 = vld [vmem:[%s4 + $0xe8] sm:$0xff]
        %v1868 = vld [vmem:[%s4 + $0xf0] sm:$0xff]
        %v1869 = vld [vmem:[%s4 + $0xf8] sm:$0xff]
        %v1870 = vld [vmem:[%s5] sm:$0x1]
        %v1872 = vlaneseq
        %v1873 = vshrl.u32 %v1872, 7
        %v1874 = vsub.s32 0, %v1873
        %v1875 = vrot.slane %v1870, %v1874
        %1877 = vmatprep.subr.mxu0 0.0
        %1878 = vmatpush1.msra.mxu0 %v1853
        %1879 = vmatprep.subr.mxu0 0.0
        %1880 = vmatpush1.msra.mxu0 %v1852
        %1881 = vmatprep.subr.mxu0 0.0
        %1882 = vmatpush1.msra.mxu0 %v1851
        %1883 = vmatprep.subr.mxu0 0.0
        %1884 = vmatpush1.msra.mxu0 %v1850
        %1885 = vmatprep.subr.mxu0 0.0
        %1886 = vmatpush1.msra.mxu0 %v1849
        %1887 = vmatprep.subr.mxu0 0.0
        %1888 = vmatpush1.msra.mxu0 %v1848
        %1889 = vmatprep.subr.mxu0 0.0
        %1890 = vmatpush1.msra.mxu0 %v1847
        %1891 = vmatprep.subr.mxu0 0.0
        %1892 = vmatpush1.msra.mxu0 %v1846
        %1893 = vmatprep.subr.mxu0 0.0
        %1894 = vmatpush1.msra.mxu0 %v1845
        %1895 = vmatprep.subr.mxu0 0.0
        %1896 = vmatpush1.msra.mxu0 %v1844
        %1897 = vmatprep.subr.mxu0 0.0
        %1898 = vmatpush1.msra.mxu0 %v1843
        %1899 = vmatprep.subr.mxu0 0.0
        %1900 = vmatpush1.msra.mxu0 %v1842
        %1901 = vmatprep.subr.mxu0 0.0
        %1902 = vmatpush1.msra.mxu0 %v1841
        %1903 = vmatprep.subr.mxu0 0.0
        %1904 = vmatpush1.msra.mxu0 %v1840
        %1905 = vmatprep.subr.mxu0 0.0
        %1906 = vmatpush1.msra.mxu0 %v1839
        %1907 = vmatprep.subr.mxu0 0.0
        %1908 = vmatpush1.msra.mxu0 %v1838
        %1909 = vmatprep.subr.mxu0 0.0
        %1910 = vmatpush2.msra.mxu0 %v1869
        %1911 = vmatprep.subr.mxu0 0.0
        %1912 = vmatpush2.msra.mxu0 %v1868
        %1913 = vmatprep.subr.mxu0 0.0
        %1914 = vmatpush2.msra.mxu0 %v1867
        %1915 = vmatprep.subr.mxu0 0.0
        %1916 = vmatpush2.msra.mxu0 %v1866
        %1917 = vmatprep.subr.mxu0 0.0
        %1918 = vmatpush2.msra.mxu0 %v1865
        %1919 = vmatprep.subr.mxu0 0.0
        %1920 = vmatpush2.msra.mxu0 %v1864
        %1921 = vmatprep.subr.mxu0 0.0
        %1922 = vmatpush2.msra.mxu0 %v1863
        %1923 = vmatprep.subr.mxu0 0.0
        %1924 = vmatpush2.msra.mxu0 %v1862
        %1925 = vmatprep.subr.mxu0 0.0
        %1926 = vmatpush2.msra.mxu0 %v1861
        %1927 = vmatprep.subr.mxu0 0.0
        %1928 = vmatpush2.msra.mxu0 %v1860
        %1929 = vmatprep.subr.mxu0 0.0
        %1930 = vmatpush2.msra.mxu0 %v1859
        %1931 = vmatprep.subr.mxu0 0.0
        %1932 = vmatpush2.msra.mxu0 %v1858
        %1933 = vmatprep.subr.mxu0 0.0
        %1934 = vmatpush2.msra.mxu0 %v1857
        %1935 = vmatprep.subr.mxu0 0.0
        %1936 = vmatpush2.msra.mxu0 %v1856
        %1937 = vmatprep.subr.mxu0 0.0
        %1938 = vmatpush2.msra.mxu0 %v1855
        %1939 = vmatprep.subr.mxu0 0.0
        %1940 = vmatpush2.msra.mxu0 %v1854
        %1941 = vmatprep.mubr.f32.mxu0 %v1837
        %1942 = vmatmul.mubr.f32.gmra.mxu0 %v1834
        %v1943 = vpop.f32.mrf.mxu0
        %v1944 = vadd.f32 %v1875, %v1943
        %v1945 = vpop.f32.mrf.mxu0
        %1946 = vdwg.mxu0
        %1947 = vst.msk [vmem:[%s242] sm:$0xff] %vm256, %v1944
        %s1948 = sand.u32 %s159, 1
        %s1949 = scalar_lea.sflag [#allocation3], %s1948
        %s1950 = sand.u32 %s159, 1
        %s1951 = smul.addr %s1950, 8
        %s1952 = scalar_lea.vmem [#allocation2], %s1951
        // Predicated region
        $region45: #{tpu_custom_call.1} parent=43 // pred_check
          %p1953 = pneg %p169
        $region46: #{tpu_custom_call.1} parent=43 // pred_check_branch
          %1955 = sbr.rel (%p1953) target = $region48
        $region47: #{tpu_custom_call.1} parent=43 // pred_region
          %s1957 = ssub.s32 128, 128
          %1958 = vsyncadd %s1949, %s1957
          %s1959 = smul.addr %s20, 128
          %s1960 = scalar_lea.hbm %s6, %s1959
          %s1962 = sshll.u32 %s1952, 4
          %s1963 = int_to_ptr.vmem [resolvable:$true] %s1962
          %1965 = dma.vmem_to_hbm [thread:$0]  %s1963, 128, %s1960, %s1949
        $region48: #{tpu_custom_call.1} parent=43 // pred_fallthru
          _
      $region44: #{tpu_custom_call.1} parent=5 // pred_fallthru
        _
      %p1966 = scmp.le.s32.totalorder 2, %s15
      // Predicated region
      $region49: #{tpu_custom_call.1} parent=5 // pred_check
        %p1967 = pneg %p1966
      $region50: #{tpu_custom_call.1} parent=5 // pred_check_branch
        %1969 = sbr.rel (%p1967) target = $region52
      $region51: #{tpu_custom_call.1} parent=5 // pred_region
        %s1970 = ssub.s32 %s15, 2
        // Predicated region
        $region53: #{tpu_custom_call.1} parent=51 // pred_check
          %p1971 = pneg %p175
        $region54: #{tpu_custom_call.1} parent=51 // pred_check_branch
          %1973 = sbr.rel (%p1971) target = $region56
        $region55: #{tpu_custom_call.1} parent=51 // pred_region
          %s1974 = sand.u32 %s160, 1
          %s1975 = scalar_lea.sflag [#allocation3], %s1974
          %s1976 = sand.u32 %s160, 1
          %s1977 = smul.addr %s1976, 8
          %s1978 = scalar_lea.vmem [#allocation2], %s1977
          %1979 = dma.done %s1975, 128
        $region56: #{tpu_custom_call.1} parent=51 // pred_fallthru
          _
      $region52: #{tpu_custom_call.1} parent=5 // pred_fallthru
        _
    $region6: #{tpu_custom_call.1} parent=1 // loop_footer
      %s19 = sadd.s32 1, %s15
    $region7: #{tpu_custom_call.1} parent=1 // loop_footer_branch
      %14 = sbr.rel target = $region3
    $region8: #{tpu_custom_call.1} parent=1 // loop_exit
      _
    %1980 = vsyncpa [#allocation3], 1
    %s1981 = scalar_lea.sflag [#allocation3], 1
    %1982 = vsyncpa %s1981, 1

</llo_original>
